<compile_context>
chip_gen: v7x
topology: tpu7x:2x2x1
jax: 0.10.0
libtpu: 0.0.40
codegen_flags: <defaults>
</compile_context>

<pallas_src>
import jax
import jax.numpy as jnp
from jax.experimental import pallas as pl
from jax.experimental.pallas import tpu as pltpu

H1, H2, H3 = 1024, 512, 256
OUT_PAD = 128                      # lane-aligned padded width of the last layer
O1 = H1                            # 1024  (128-aligned)
O2 = H1 + H2                       # 1536  (128-aligned)
O3 = H1 + H2 + H3                  # 1792  (128-aligned)
OTOT = O3 + OUT_PAD                # 1920  (128-aligned)


# ---------------------------------------------------------------------------
# Kernels
# ---------------------------------------------------------------------------
def dnn_kernel_overlap(x_ref, w1_ref, w2_hbm, w3_hbm, w4_hbm, b_ref, o_ref,
                       w2_v, w3_v, w4_v, sem):
    """Small-batch path: w2/w3/w4 streamed manually, overlapping compute."""
    # Kick off w2/w3/w4 HBM->VMEM copies immediately (DMA engine runs
    # concurrently with the MXU/VPU work below).
    c2 = pltpu.make_async_copy(w2_hbm, w2_v, sem.at[0])
    c3 = pltpu.make_async_copy(w3_hbm, w3_v, sem.at[1])
    c4 = pltpu.make_async_copy(w4_hbm, w4_v, sem.at[2])
    c2.start()
    c3.start()
    c4.start()

    # Layer 1: bf16 x bf16 -> f32 accumulate; bias + ReLU in f32.
    h = jnp.dot(x_ref[...], w1_ref[...], preferred_element_type=jnp.float32)
    h = jnp.maximum(h + b_ref[:, 0:O1], 0.0)

    # Layer 2
    c2.wait()
    h = jnp.dot(h.astype(jnp.bfloat16), w2_v[...],
                preferred_element_type=jnp.float32)
    h = jnp.maximum(h + b_ref[:, O1:O2], 0.0)

    # Layer 3
    c3.wait()
    h = jnp.dot(h.astype(jnp.bfloat16), w3_v[...],
                preferred_element_type=jnp.float32)
    h = jnp.maximum(h + b_ref[:, O2:O3], 0.0)

    # Layer 4 (no activation); output is lane-dense (128 wide).
    c4.wait()
    h = jnp.dot(h.astype(jnp.bfloat16), w4_v[...],
                preferred_element_type=jnp.float32)
    o_ref[...] = (h + b_ref[:, O3:OTOT]).astype(o_ref.dtype)


def dnn_kernel_tiled(x_ref, w1_ref, w2_ref, w3_ref, w4_ref, b_ref, o_ref):
    """Batch-tiled path: all operands auto-DMA'd; constant index_maps keep the
    weights VMEM-resident across grid steps."""
    h = jnp.dot(x_ref[...], w1_ref[...], preferred_element_type=jnp.float32)
    h = jnp.maximum(h + b_ref[:, 0:O1], 0.0)
    h = jnp.dot(h.astype(jnp.bfloat16), w2_ref[...],
                preferred_element_type=jnp.float32)
    h = jnp.maximum(h + b_ref[:, O1:O2], 0.0)
    h = jnp.dot(h.astype(jnp.bfloat16), w3_ref[...],
                preferred_element_type=jnp.float32)
    h = jnp.maximum(h + b_ref[:, O2:O3], 0.0)
    h = jnp.dot(h.astype(jnp.bfloat16), w4_ref[...],
                preferred_element_type=jnp.float32)
    o_ref[...] = (h + b_ref[:, O3:OTOT]).astype(o_ref.dtype)


# ---------------------------------------------------------------------------
# Parameter packing / cost model
# ---------------------------------------------------------------------------
def pack_params(params, num_classes):
    """Cast weights to bf16, pad the last layer to 128 lanes, pack biases."""
    (w1, b1), (w2, b2), (w3, b3), (w4, b4) = params
    w1 = w1.astype(jnp.bfloat16)
    w2 = w2.astype(jnp.bfloat16)
    w3 = w3.astype(jnp.bfloat16)
    w4p = jnp.zeros((w4.shape[0], OUT_PAD), jnp.float32)
    w4p = w4p.at[:, :num_classes].set(w4).astype(jnp.bfloat16)
    b4p = jnp.zeros((1, OUT_PAD), jnp.float32).at[:, :num_classes].set(b4)
    # One packed f32 bias buffer -> one DMA instead of four tiny ones.
    biases = jnp.concatenate([b1, b2, b3, b4p], axis=1)  # (1, 1920) f32
    return w1, w2, w3, w4p, biases


def _cost_estimate(batch, in_features):
    mac = in_features * H1 + H1 * H2 + H2 * H3 + H3 * OUT_PAD
    weight_bytes = 2 * mac                      # bf16 weights
    bias_bytes = 4 * OTOT                       # packed f32 biases
    io_bytes = 2 * batch * in_features + 4 * batch * OUT_PAD
    return pl.CostEstimate(flops=2 * batch * mac,
                           transcendentals=0,
                           bytes_accessed=weight_bytes + bias_bytes + io_bytes)


# ---------------------------------------------------------------------------
# Forward wrappers
# ---------------------------------------------------------------------------
def _forward_small(x_bf, packed):
    w1, w2, w3, w4, biases = packed
    B, F = x_bf.shape
    vmem = pl.BlockSpec(memory_space=pltpu.MemorySpace.VMEM)
    anyspace = pl.BlockSpec(memory_space=pl.ANY)
    return pl.pallas_call(
        dnn_kernel_overlap,
        out_shape=jax.ShapeDtypeStruct((B, OUT_PAD), jnp.float32),
        in_specs=[vmem, vmem, anyspace, anyspace, anyspace, vmem],
        out_specs=vmem,
        scratch_shapes=[
            pltpu.VMEM((H1, H2), jnp.bfloat16),
            pltpu.VMEM((H2, H3), jnp.bfloat16),
            pltpu.VMEM((H3, OUT_PAD), jnp.bfloat16),
            pltpu.SemaphoreType.DMA((3,)),
        ],
        compiler_params=pltpu.CompilerParams(vmem_limit_bytes=32 * 1024 * 1024),
        cost_estimate=_cost_estimate(B, F),
    )(x_bf, w1, w2, w3, w4, biases)


def _forward_tiled(x_bf, packed, tile_b):
    w1, w2, w3, w4, biases = packed
    B, F = x_bf.shape
    nb = pl.cdiv(B, tile_b)
    Bp = nb * tile_b
    if Bp != B:
        x_bf = jnp.pad(x_bf, ((0, Bp - B), (0, 0)))
    out = pl.pallas_call(
        dnn_kernel_tiled,
        out_shape=jax.ShapeDtypeStruct((Bp, OUT_PAD), jnp.float32),
        grid=(nb,),
        in_specs=[
            pl.BlockSpec((tile_b, F), lambda i: (i, 0)),
            pl.BlockSpec((F, H1), lambda i: (0, 0)),
            pl.BlockSpec((H1, H2), lambda i: (0, 0)),
            pl.BlockSpec((H2, H3), lambda i: (0, 0)),
            pl.BlockSpec((H3, OUT_PAD), lambda i: (0, 0)),
            pl.BlockSpec((1, OTOT), lambda i: (0, 0)),
        ],
        out_specs=pl.BlockSpec((tile_b, OUT_PAD), lambda i: (i, 0)),
        compiler_params=pltpu.CompilerParams(
            dimension_semantics=("parallel",),
            vmem_limit_bytes=32 * 1024 * 1024),
        cost_estimate=_cost_estimate(Bp, F),
    )(x_bf, w1, w2, w3, w4, biases)
    return out[:B]


def dnn_forward(x, packed, num_classes, tile_b=256):
    x_bf = x.astype(jnp.bfloat16)
    if x.shape[0] <= tile_b:
        out = _forward_small(x_bf, packed)
    else:
        out = _forward_tiled(x_bf, packed, tile_b)
    return out[:, :num_classes]


# ---------------------------------------------------------------------------
# Init + references
# ---------------------------------------------------------------------------
def init_linear(key, in_features, out_features):
    # Mimics PyTorch nn.Linear default init: U(-1/sqrt(in), 1/sqrt(in)).
    # Weight returned pre-transposed as (in, out) so the kernel does x @ W + b.
    kw, kb = jax.random.split(key)
    bound = 1.0 / jnp.sqrt(jnp.float32(in_features))
    w = jax.random.uniform(kw, (in_features, out_features), jnp.float32,
                           minval=-bound, maxval=bound)
    b = jax.random.uniform(kb, (1, out_features), jnp.float32,
                           minval=-bound, maxval=bound)
    return w, b


def reference_forward_bf16(x, packed, num_classes):
    # Pure-JAX reference with identical numerics (bf16 operands, f32 accum).
    w1, w2, w3, w4, b = packed
    b1, b2, b3, b4 = b[:, :O1], b[:, O1:O2], b[:, O2:O3], b[:, O3:OTOT]
    h = jnp.dot(x.astype(jnp.bfloat16), w1, preferred_element_type=jnp.float32)
    h = jnp.maximum(h + b1, 0.0)
    h = jnp.dot(h.astype(jnp.bfloat16), w2, preferred_element_type=jnp.float32)
    h = jnp.maximum(h + b2, 0.0)
    h = jnp.dot(h.astype(jnp.bfloat16), w3, preferred_element_type=jnp.float32)
    h = jnp.maximum(h + b3, 0.0)
    h = jnp.dot(h.astype(jnp.bfloat16), w4, preferred_element_type=jnp.float32)
    return (h + b4)[:, :num_classes]


def reference_forward_f32(x, params, num_classes):
    # Full-precision reference matching the PyTorch module's numerics.
    (w1, b1), (w2, b2), (w3, b3), (w4, b4) = params
    h = jnp.maximum(x @ w1 + b1, 0.0)
    h = jnp.maximum(h @ w2 + b2, 0.0)
    h = jnp.maximum(h @ w3 + b3, 0.0)
    return (h @ w4 + b4)[:, :num_classes]


if __name__ == "__main__":
    input_layer = 32
    num_classes = 10

    key = jax.random.PRNGKey(0)
    kx, kx2, k1, k2, k3, k4 = jax.random.split(key, 6)

    params = (
        init_linear(k1, input_layer, H1),
        init_linear(k2, H1, H2),
        init_linear(k3, H2, H3),
        init_linear(k4, H3, num_classes),
    )
    packed = pack_params(params, num_classes)

    # ---- Small-batch path (no grid, manual w2-w4 DMA overlapped with compute)
    x_small = jax.random.normal(kx, (8, input_layer), jnp.float32)
    out_small = jax.block_until_ready(dnn_forward(x_small, packed, num_classes))
    ref_bf16 = reference_forward_bf16(x_small, packed, num_classes)
    ref_f32 = reference_forward_f32(x_small, params, num_classes)
    assert out_small.shape == (8, num_classes)
    assert jnp.allclose(out_small, ref_bf16, atol=2e-3, rtol=2e-3), \
        "small path mismatch vs bf16-consistent reference"
    assert jnp.allclose(out_small, ref_f32, atol=5e-2, rtol=5e-2), \
        "small path drifted too far from f32 reference"

    # ---- Batch-tiled path (grid over batch, weights VMEM-resident, "parallel")
    x_big = jax.random.normal(kx2, (384, input_layer), jnp.float32)
    out_big = jax.block_until_ready(
        dnn_forward(x_big, packed, num_classes, tile_b=256))
    ref_big = reference_forward_bf16(x_big, packed, num_classes)
    assert out_big.shape == (384, num_classes)
    assert jnp.allclose(out_big, ref_big, atol=2e-3, rtol=2e-3), \
        "tiled path mismatch vs bf16-consistent reference"

    print("KERNEL_OK")
</pallas_src>

<mosaic_0001>
module attributes {stable_mosaic.version = 11 : i64} {
  func.func @dnn_kernel_overlap(%arg0: memref<8x32xbf16, #tpu.memory_space<vmem>>, %arg1: memref<32x1024xbf16, #tpu.memory_space<vmem>>, %arg2: memref<1024x512xbf16, #tpu.memory_space<any>>, %arg3: memref<512x256xbf16, #tpu.memory_space<any>>, %arg4: memref<256x128xbf16, #tpu.memory_space<any>>, %arg5: memref<1x1920xf32, #tpu.memory_space<vmem>>, %arg6: memref<8x128xf32, #tpu.memory_space<vmem>>, %arg7: memref<1024x512xbf16, #tpu.memory_space<vmem>>, %arg8: memref<512x256xbf16, #tpu.memory_space<vmem>>, %arg9: memref<256x128xbf16, #tpu.memory_space<vmem>>, %arg10: memref<3x!tpu.dma_semaphore, #tpu.memory_space<semaphore_mem>>) attributes {dimension_semantics = [], scalar_prefetch = 0 : i64, scratch_operands = 4 : i64, tpu.core_type = #tpu.core_type<tc>} {
    %c0_i32 = arith.constant 0 : i32
    %0 = tpu.memref_slice %arg10[%c0_i32] : memref<3x!tpu.dma_semaphore, #tpu.memory_space<semaphore_mem>> -> memref<1x!tpu.dma_semaphore, #tpu.memory_space<semaphore_mem>>
    %1 = tpu.memref_squeeze %0 : memref<1x!tpu.dma_semaphore, #tpu.memory_space<semaphore_mem>> -> memref<!tpu.dma_semaphore, #tpu.memory_space<semaphore_mem>>
    tpu.enqueue_dma source(%arg2 : memref<1024x512xbf16, #tpu.memory_space<any>>) target(%arg7 : memref<1024x512xbf16, #tpu.memory_space<vmem>>) target_semaphore(%1 : memref<!tpu.dma_semaphore, #tpu.memory_space<semaphore_mem>>)
    %c1_i32 = arith.constant 1 : i32
    %2 = tpu.memref_slice %arg10[%c1_i32] : memref<3x!tpu.dma_semaphore, #tpu.memory_space<semaphore_mem>> -> memref<1x!tpu.dma_semaphore, #tpu.memory_space<semaphore_mem>>
    %3 = tpu.memref_squeeze %2 : memref<1x!tpu.dma_semaphore, #tpu.memory_space<semaphore_mem>> -> memref<!tpu.dma_semaphore, #tpu.memory_space<semaphore_mem>>
    tpu.enqueue_dma source(%arg3 : memref<512x256xbf16, #tpu.memory_space<any>>) target(%arg8 : memref<512x256xbf16, #tpu.memory_space<vmem>>) target_semaphore(%3 : memref<!tpu.dma_semaphore, #tpu.memory_space<semaphore_mem>>)
    %c2_i32 = arith.constant 2 : i32
    %4 = tpu.memref_slice %arg10[%c2_i32] : memref<3x!tpu.dma_semaphore, #tpu.memory_space<semaphore_mem>> -> memref<1x!tpu.dma_semaphore, #tpu.memory_space<semaphore_mem>>
    %5 = tpu.memref_squeeze %4 : memref<1x!tpu.dma_semaphore, #tpu.memory_space<semaphore_mem>> -> memref<!tpu.dma_semaphore, #tpu.memory_space<semaphore_mem>>
    tpu.enqueue_dma source(%arg4 : memref<256x128xbf16, #tpu.memory_space<any>>) target(%arg9 : memref<256x128xbf16, #tpu.memory_space<vmem>>) target_semaphore(%5 : memref<!tpu.dma_semaphore, #tpu.memory_space<semaphore_mem>>)
    %c0 = arith.constant 0 : index
    %c0_0 = arith.constant 0 : index
    %6 = vector.load %arg0[%c0, %c0_0] : memref<8x32xbf16, #tpu.memory_space<vmem>>, vector<8x32xbf16>
    %c0_1 = arith.constant 0 : index
    %c0_2 = arith.constant 0 : index
    %7 = vector.load %arg1[%c0_1, %c0_2] : memref<32x1024xbf16, #tpu.memory_space<vmem>>, vector<32x1024xbf16>
    %cst = arith.constant dense<0.000000e+00> : vector<8x1024xf32>
    %8 = tpu.matmul %6, %7, %cst {dimension_numbers = #tpu.dot_dimension_numbers<[1], [0], [0], [1], [0, 0, 1, 1], [], []>} : vector<8x32xbf16>, vector<32x1024xbf16>, vector<8x1024xf32> -> vector<8x1024xf32>
    %c0_3 = arith.constant 0 : index
    %c0_4 = arith.constant 0 : index
    %9 = vector.load %arg5[%c0_3, %c0_4] : memref<1x1920xf32, #tpu.memory_space<vmem>>, vector<1x1024xf32>
    %10 = vector.broadcast %9 : vector<1x1024xf32> to vector<8x1024xf32>
    %11 = arith.addf %8, %10 : vector<8x1024xf32>
    %cst_5 = arith.constant 0.000000e+00 : f32
    %12 = vector.broadcast %cst_5 : f32 to vector<8x1024xf32>
    %13 = arith.maximumf %11, %12 : vector<8x1024xf32>
    %c0_i32_6 = arith.constant 0 : i32
    %14 = tpu.memref_slice %arg10[%c0_i32_6] : memref<3x!tpu.dma_semaphore, #tpu.memory_space<semaphore_mem>> -> memref<1x!tpu.dma_semaphore, #tpu.memory_space<semaphore_mem>>
    %15 = tpu.memref_squeeze %14 : memref<1x!tpu.dma_semaphore, #tpu.memory_space<semaphore_mem>> -> memref<!tpu.dma_semaphore, #tpu.memory_space<semaphore_mem>>
    tpu.wait_dma2 semaphore(%15 : memref<!tpu.dma_semaphore, #tpu.memory_space<semaphore_mem>>) src(%arg2 : memref<1024x512xbf16, #tpu.memory_space<any>>) dst(%arg7 : memref<1024x512xbf16, #tpu.memory_space<vmem>>)
    %16 = arith.truncf %13 : vector<8x1024xf32> to vector<8x1024xbf16>
    %c0_7 = arith.constant 0 : index
    %c0_8 = arith.constant 0 : index
    %17 = vector.load %arg7[%c0_7, %c0_8] : memref<1024x512xbf16, #tpu.memory_space<vmem>>, vector<1024x512xbf16>
    %cst_9 = arith.constant dense<0.000000e+00> : vector<8x512xf32>
    %18 = tpu.matmul %16, %17, %cst_9 {dimension_numbers = #tpu.dot_dimension_numbers<[1], [0], [0], [1], [0, 0, 1, 1], [], []>} : vector<8x1024xbf16>, vector<1024x512xbf16>, vector<8x512xf32> -> vector<8x512xf32>
    %c0_10 = arith.constant 0 : index
    %c1024 = arith.constant 1024 : index
    %19 = vector.load %arg5[%c0_10, %c1024] : memref<1x1920xf32, #tpu.memory_space<vmem>>, vector<1x512xf32>
    %20 = vector.broadcast %19 : vector<1x512xf32> to vector<8x512xf32>
    %21 = arith.addf %18, %20 : vector<8x512xf32>
    %cst_11 = arith.constant 0.000000e+00 : f32
    %22 = vector.broadcast %cst_11 : f32 to vector<8x512xf32>
    %23 = arith.maximumf %21, %22 : vector<8x512xf32>
    %c1_i32_12 = arith.constant 1 : i32
    %24 = tpu.memref_slice %arg10[%c1_i32_12] : memref<3x!tpu.dma_semaphore, #tpu.memory_space<semaphore_mem>> -> memref<1x!tpu.dma_semaphore, #tpu.memory_space<semaphore_mem>>
    %25 = tpu.memref_squeeze %24 : memref<1x!tpu.dma_semaphore, #tpu.memory_space<semaphore_mem>> -> memref<!tpu.dma_semaphore, #tpu.memory_space<semaphore_mem>>
    tpu.wait_dma2 semaphore(%25 : memref<!tpu.dma_semaphore, #tpu.memory_space<semaphore_mem>>) src(%arg3 : memref<512x256xbf16, #tpu.memory_space<any>>) dst(%arg8 : memref<512x256xbf16, #tpu.memory_space<vmem>>)
    %26 = arith.truncf %23 : vector<8x512xf32> to vector<8x512xbf16>
    %c0_13 = arith.constant 0 : index
    %c0_14 = arith.constant 0 : index
    %27 = vector.load %arg8[%c0_13, %c0_14] : memref<512x256xbf16, #tpu.memory_space<vmem>>, vector<512x256xbf16>
    %cst_15 = arith.constant dense<0.000000e+00> : vector<8x256xf32>
    %28 = tpu.matmul %26, %27, %cst_15 {dimension_numbers = #tpu.dot_dimension_numbers<[1], [0], [0], [1], [0, 0, 1, 1], [], []>} : vector<8x512xbf16>, vector<512x256xbf16>, vector<8x256xf32> -> vector<8x256xf32>
    %c0_16 = arith.constant 0 : index
    %c1536 = arith.constant 1536 : index
    %29 = vector.load %arg5[%c0_16, %c1536] : memref<1x1920xf32, #tpu.memory_space<vmem>>, vector<1x256xf32>
    %30 = vector.broadcast %29 : vector<1x256xf32> to vector<8x256xf32>
    %31 = arith.addf %28, %30 : vector<8x256xf32>
    %cst_17 = arith.constant 0.000000e+00 : f32
    %32 = vector.broadcast %cst_17 : f32 to vector<8x256xf32>
    %33 = arith.maximumf %31, %32 : vector<8x256xf32>
    %c2_i32_18 = arith.constant 2 : i32
    %34 = tpu.memref_slice %arg10[%c2_i32_18] : memref<3x!tpu.dma_semaphore, #tpu.memory_space<semaphore_mem>> -> memref<1x!tpu.dma_semaphore, #tpu.memory_space<semaphore_mem>>
    %35 = tpu.memref_squeeze %34 : memref<1x!tpu.dma_semaphore, #tpu.memory_space<semaphore_mem>> -> memref<!tpu.dma_semaphore, #tpu.memory_space<semaphore_mem>>
    tpu.wait_dma2 semaphore(%35 : memref<!tpu.dma_semaphore, #tpu.memory_space<semaphore_mem>>) src(%arg4 : memref<256x128xbf16, #tpu.memory_space<any>>) dst(%arg9 : memref<256x128xbf16, #tpu.memory_space<vmem>>)
    %36 = arith.truncf %33 : vector<8x256xf32> to vector<8x256xbf16>
    %c0_19 = arith.constant 0 : index
    %c0_20 = arith.constant 0 : index
    %37 = vector.load %arg9[%c0_19, %c0_20] : memref<256x128xbf16, #tpu.memory_space<vmem>>, vector<256x128xbf16>
    %cst_21 = arith.constant dense<0.000000e+00> : vector<8x128xf32>
    %38 = tpu.matmul %36, %37, %cst_21 {dimension_numbers = #tpu.dot_dimension_numbers<[1], [0], [0], [1], [0, 0, 1, 1], [], []>} : vector<8x256xbf16>, vector<256x128xbf16>, vector<8x128xf32> -> vector<8x128xf32>
    %c0_22 = arith.constant 0 : index
    %c1792 = arith.constant 1792 : index
    %39 = vector.load %arg5[%c0_22, %c1792] : memref<1x1920xf32, #tpu.memory_space<vmem>>, vector<1x128xf32>
    %40 = vector.broadcast %39 : vector<1x128xf32> to vector<8x128xf32>
    %41 = arith.addf %38, %40 : vector<8x128xf32>
    %c0_23 = arith.constant 0 : index
    %c0_24 = arith.constant 0 : index
    %42 = vector.load %arg6[%c0_23, %c0_24] : memref<8x128xf32, #tpu.memory_space<vmem>>, vector<8x128xf32>
    tpu.vector_store %arg6[%c0_23, %c0_24], %41 {strides = array<i32>} : memref<8x128xf32, #tpu.memory_space<vmem>>, vector<8x128xf32>,
    return
  }
}

</mosaic_0001>

<llo_original>
// kernel: tpu_custom_call.1
$region0: #{tpu_custom_call.1}
  #allocation0 [shape = 'u32[]', space=smem, size = 0x4, offset = 0x4, fixed_abs, tag = 'smem constant byte address 0x4 - core index']
  #allocation1 [shape = 'u32[144,128]{1,0:T(1,128)}', space=vmem, size = 0x12000, scoped, tag = 'internal scratch']
  #allocation2 [shape = 'bf16[1024,512]{1,0:T(16,128)(2,1)}', space=vmem, size = 0x100000, scoped, tag = 'scratch operand']
  #allocation3 [shape = 'bf16[512,256]{1,0:T(16,128)(2,1)}', space=vmem, size = 0x40000, scoped, tag = 'scratch operand']
  #allocation4 [shape = 'bf16[256,128]{1,0:T(16,128)(2,1)}', space=vmem, size = 0x10000, scoped, tag = 'scratch operand']
  #allocation5 [shape = 's32[3]{0}', space=sflag, size = 0xc, scoped, tag = 'scratch operand']
  #allocation12 [shape = 's32[]', space=sflag, size = 0x4, offset = 0, fixed_abs, tag = 'sflag constant byte address 0x0 - dummy sync flag']
  #allocation14 [shape = 's32[]', space=sflag, size = 0x4, offset = 0, fixed_abs, tag = 'sflag constant byte address 0x0 - dummy sync flag']
  #allocation16 [shape = 's32[]', space=sflag, size = 0x4, offset = 0, fixed_abs, tag = 'sflag constant byte address 0x0 - dummy sync flag']
  #allocation17 [shape = 's32[]', space=sflag, size = 0x4, offset = 0, fixed_abs, tag = 'sflag constant byte address 0x0 - dummy sync flag']
  #allocation18 [shape = 'u32[]', space=smem, size = 0x4, offset = 0x44, fixed_abs, tag = 'smem constant byte address 0x44 - assertion arg 0']
  #allocation19 [shape = 'u32[]', space=smem, size = 0x4, offset = 0x48, fixed_abs, tag = 'smem constant byte address 0x48 - assertion arg 1']
  %s0 = inlined_call_operand.hbm [shape: bf16[8,32], index: 0, kind: input, shape index: {}]
  %s1 = inlined_call_operand.hbm [shape: bf16[32,1024], index: 1, kind: input, shape index: {}]
  %s2 = inlined_call_operand.hbm [shape: bf16[1024,512], index: 2, kind: input, shape index: {}]
  %s3 = inlined_call_operand.hbm [shape: bf16[512,256], index: 3, kind: input, shape index: {}]
  %s4 = inlined_call_operand.hbm [shape: bf16[256,128], index: 4, kind: input, shape index: {}]
  %s5 = inlined_call_operand.vmem [shape: f32[1,1920], index: 5, kind: input, shape index: {}]
  %s6 = inlined_call_operand.hbm [shape: f32[8,128], index: 6, kind: output, shape index: {}]
  %s7 = sld [smem:[#allocation0]]
  $region34: #{tpu_custom_call.1} parent=0
    _
  %s9 = ssub.s32 1, %s7
  %s10 = scalar_select 0, %s9, %s7
  $region1: #{tpu_custom_call.1} parent=0
    #allocation6 [shape = 'u8[2048]{0}', space=vmem, size = 0x800, scoped, tag = 'input window, operand 0, single buffered']
    #allocation7 [shape = 's32[1]{0}', space=sflag, size = 0x4, scoped, tag = 'scoped memory for tpu_custom_call.1']
    #allocation8 [shape = 's32[1]{0}', space=sflag, size = 0x4, scoped, tag = 'scoped memory for tpu_custom_call.1']
    #allocation9 [shape = 'u8[65536]{0}', space=vmem, size = 0x10000, scoped, tag = 'input window, operand 1, single buffered']
    #allocation10 [shape = 's32[1]{0}', space=sflag, size = 0x4, scoped, tag = 'scoped memory for tpu_custom_call.1']
    #allocation11 [shape = 'u8[4096]{0}', space=vmem, size = 0x1000, scoped, tag = 'output window, operand 0, single buffered']
    #allocation13 [shape = 'u32[9]{0}', space=smem, size = 0x24, scoped, tag = 'DMA stride descriptor']
    #allocation15 [shape = 'u32[9]{0}', space=smem, size = 0x24, scoped, tag = 'DMA stride descriptor']
    %11 = vsyncpa [#allocation7], 0
    %12 = vsyncpa [#allocation10], 0
    %13 = vsyncpa [#allocation8], 0
    // Predicated region
    $region2: #{tpu_custom_call.1} parent=1 // pred_check
      _
    $region3: #{tpu_custom_call.1} parent=1 // pred_check_branch
      %15 = sbr.rel (0) target = $region5
    $region4: #{tpu_custom_call.1} parent=1 // pred_region
      %s17 = ssub.s32 64, 64
      %18 = vsyncadd [#allocation7], %s17
      %s20 = sshll.u32 [#allocation6], 4
      %s21 = int_to_ptr.vmem [resolvable:$true] %s20
      %23 = dma.hbm_to_vmem [thread:$0]  %s0, 64, %s21, [#allocation7]
    $region5: #{tpu_custom_call.1} parent=1 // pred_fallthru
      _
    // Predicated region
    $region6: #{tpu_custom_call.1} parent=1 // pred_check
      _
    $region7: #{tpu_custom_call.1} parent=1 // pred_check_branch
      %25 = sbr.rel (0) target = $region9
    $region8: #{tpu_custom_call.1} parent=1 // pred_region
      %s27 = ssub.s32 2048, 2048
      %28 = vsyncadd [#allocation10], %s27
      %s29 = sshll.u32 [#allocation9], 4
      %s30 = int_to_ptr.vmem [resolvable:$true] %s29
      %35 = dma.hbm_to_vmem [thread:$0]  %s1, 2048, %s30, [#allocation10], 512, 512, 32
    $region9: #{tpu_custom_call.1} parent=1 // pred_fallthru
      _
    // Predicated region
    $region10: #{tpu_custom_call.1} parent=1 // pred_check
      _
    $region11: #{tpu_custom_call.1} parent=1 // pred_check_branch
      %37 = sbr.rel (0) target = $region13
    $region12: #{tpu_custom_call.1} parent=1 // pred_region
      _
    $region13: #{tpu_custom_call.1} parent=1 // pred_fallthru
      _
    // Predicated region
    $region14: #{tpu_custom_call.1} parent=1 // pred_check
      _
    $region15: #{tpu_custom_call.1} parent=1 // pred_check_branch
      %39 = sbr.rel (0) target = $region17
    $region16: #{tpu_custom_call.1} parent=1 // pred_region
      %40 = dma.done [#allocation7], 64
    $region17: #{tpu_custom_call.1} parent=1 // pred_fallthru
      _
    // Predicated region
    $region18: #{tpu_custom_call.1} parent=1 // pred_check
      _
    $region19: #{tpu_custom_call.1} parent=1 // pred_check_branch
      %42 = sbr.rel (0) target = $region21
    $region20: #{tpu_custom_call.1} parent=1 // pred_region
      %43 = dma.done [#allocation10], 2048
    $region21: #{tpu_custom_call.1} parent=1 // pred_fallthru
      _
    %s46 = sshll.u32 1, 14
    %s47 = sxor.u32 4294967295, %s46
    %s49 = sld [smem:[#allocation0]]
    %s50 = sadd.s32 2, %s49
    %s52 = sshll.u32 7, 26
    %s53 = sxor.u32 4294967295, %s52
    %s54 = sand.u32 0, %s53
    %s55 = sshll.u32 %s50, 26
    %s56 = sor.u32 %s54, %s55
    %s57 = sshll.u32 [#allocation2], 4
    %s58 = int_to_ptr.vmem [resolvable:$true] %s57
    %61 = sst [smem:[#allocation13]] 512
    %s62 = scalar_lea.smem [#allocation13], 1
    %63 = sst [smem:[%s62]] 512
    %s64 = scalar_lea.smem [#allocation13], 2
    %65 = sst [smem:[%s64]] 4
    %s66 = scalar_lea.smem [#allocation13], 3
    %67 = sst [smem:[%s66]] 64
    %s68 = scalar_lea.smem [#allocation13], 4
    %69 = sst [smem:[%s68]] 128
    %s70 = scalar_lea.smem [#allocation13], 5
    %71 = sst [smem:[%s70]] 2
    %s72 = scalar_lea.smem [#allocation13], 6
    %73 = sst [smem:[%s72]] 256
    %s74 = scalar_lea.smem [#allocation13], 7
    %75 = sst [smem:[%s74]] 64
    %s76 = scalar_lea.smem [#allocation13], 8
    %77 = sst [smem:[%s76]] 4
    %79 = dma.general %s2, 32768, %s58, [#allocation5], [#allocation12], [#allocation13], %s56, 0
    %s80 = scalar_lea.sflag [#allocation5], 1
    %s82 = sshll.u32 1, 14
    %s83 = sxor.u32 4294967295, %s82
    %s85 = sadd.s32 2, %s49
    %s87 = sshll.u32 7, 26
    %s88 = sxor.u32 4294967295, %s87
    %s89 = sand.u32 0, %s88
    %s90 = sshll.u32 %s85, 26
    %s91 = sor.u32 %s89, %s90
    %s92 = sshll.u32 [#allocation3], 4
    %s93 = int_to_ptr.vmem [resolvable:$true] %s92
    %96 = sst [smem:[#allocation15]] 256
    %s97 = scalar_lea.smem [#allocation15], 1
    %98 = sst [smem:[%s97]] 256
    %s99 = scalar_lea.smem [#allocation15], 2
    %100 = sst [smem:[%s99]] 2
    %s101 = scalar_lea.smem [#allocation15], 3
    %102 = sst [smem:[%s101]] 64
    %s103 = scalar_lea.smem [#allocation15], 4
    %104 = sst [smem:[%s103]] 128
    %s105 = scalar_lea.smem [#allocation15], 5
    %106 = sst [smem:[%s105]] 2
    %s107 = scalar_lea.smem [#allocation15], 6
    %108 = sst [smem:[%s107]] 128
    %s109 = scalar_lea.smem [#allocation15], 7
    %110 = sst [smem:[%s109]] 64
    %s111 = scalar_lea.smem [#allocation15], 8
    %112 = sst [smem:[%s111]] 4
    %114 = dma.general %s3, 8192, %s93, %s80, [#allocation14], [#allocation15], %s91, 0
    %s115 = scalar_lea.sflag [#allocation5], 2
    // Predicated region
    $region22: #{tpu_custom_call.1} parent=1 // pred_check
      _
    $region23: #{tpu_custom_call.1} parent=1 // pred_check_branch
      %117 = sbr.rel target = $region25
    $region24: #{tpu_custom_call.1} parent=1 // pred_region
      %118 = sst [smem:[#allocation18]] [#allocation17]
      %119 = sst [smem:[#allocation19]] [#allocation16]
    $region25: #{tpu_custom_call.1} parent=1 // pred_fallthru
      _
    %121 = shalt.err (0)
    %s123 = sshll.u32 [#allocation4], 4
    %s124 = int_to_ptr.vmem [resolvable:$true] %s123
    %126 = dma.hbm_to_vmem [thread:$0]  %s4, 2048, %s124, %s115
    %v127 = vld [vmem:[#allocation6] sm:$0xf]
    %v128 = vld [vmem:[#allocation9] sm:$0xff]
    %v129 = vld [vmem:[#allocation9 + $0x8] sm:$0xff]
    %v130 = vld [vmem:[#allocation9 + $0x10] sm:$0xff]
    %v131 = vld [vmem:[#allocation9 + $0x18] sm:$0xff]
    %v132 = vld [vmem:[#allocation9 + $0x20] sm:$0xff]
    %v133 = vld [vmem:[#allocation9 + $0x28] sm:$0xff]
    %v134 = vld [vmem:[#allocation9 + $0x30] sm:$0xff]
    %v135 = vld [vmem:[#allocation9 + $0x38] sm:$0xff]
    %v136 = vld [vmem:[#allocation9 + $0x40] sm:$0xff]
    %v137 = vld [vmem:[#allocation9 + $0x48] sm:$0xff]
    %v138 = vld [vmem:[#allocation9 + $0x50] sm:$0xff]
    %v139 = vld [vmem:[#allocation9 + $0x58] sm:$0xff]
    %v140 = vld [vmem:[#allocation9 + $0x60] sm:$0xff]
    %v141 = vld [vmem:[#allocation9 + $0x68] sm:$0xff]
    %v142 = vld [vmem:[#allocation9 + $0x70] sm:$0xff]
    %v143 = vld [vmem:[#allocation9 + $0x78] sm:$0xff]
    %v144 = vld [vmem:[%s5] sm:$0xff]
    %v146 = vlaneseq
    %v147 = vshrl.u32 %v146, 7
    %v148 = vsub.s32 0, %v147
    %v149 = vrot.slane %v144, %v148
    %v150 = vlaneseq
    %v151 = vshrl.u32 %v150, 7
    %v152 = vsub.s32 1, %v151
    %v153 = vrot.slane %v144, %v152
    %v154 = vlaneseq
    %v155 = vshrl.u32 %v154, 7
    %v156 = vsub.s32 2, %v155
    %v157 = vrot.slane %v144, %v156
    %v158 = vlaneseq
    %v159 = vshrl.u32 %v158, 7
    %v160 = vsub.s32 3, %v159
    %v161 = vrot.slane %v144, %v160
    %v162 = vlaneseq
    %v163 = vshrl.u32 %v162, 7
    %v164 = vsub.s32 4, %v163
    %v165 = vrot.slane %v144, %v164
    %v166 = vlaneseq
    %v167 = vshrl.u32 %v166, 7
    %v168 = vsub.s32 5, %v167
    %v169 = vrot.slane %v144, %v168
    %v170 = vlaneseq
    %v171 = vshrl.u32 %v170, 7
    %v172 = vsub.s32 6, %v171
    %v173 = vrot.slane %v144, %v172
    %v174 = vlaneseq
    %v175 = vshrl.u32 %v174, 7
    %v176 = vsub.s32 7, %v175
    %v177 = vrot.slane %v144, %v176
    %v202 = vunpack.c.l.b16 %v128
    %v203 = vunpack.c.h.b16 %v128
    %v204 = vunpack.c.l.b16 %v129
    %v205 = vunpack.c.h.b16 %v129
    %v206 = vunpack.c.l.b16 %v130
    %v207 = vunpack.c.h.b16 %v130
    %v208 = vunpack.c.l.b16 %v131
    %v209 = vunpack.c.h.b16 %v131
    %v210 = vunpack.c.l.b16 %v132
    %v211 = vunpack.c.h.b16 %v132
    %v212 = vunpack.c.l.b16 %v133
    %v213 = vunpack.c.h.b16 %v133
    %v214 = vunpack.c.l.b16 %v134
    %v215 = vunpack.c.h.b16 %v134
    %v216 = vunpack.c.l.b16 %v135
    %v217 = vunpack.c.h.b16 %v135
    %v218 = vunpack.c.l.b16 %v136
    %v219 = vunpack.c.h.b16 %v136
    %v220 = vunpack.c.l.b16 %v137
    %v221 = vunpack.c.h.b16 %v137
    %v222 = vunpack.c.l.b16 %v138
    %v223 = vunpack.c.h.b16 %v138
    %v224 = vunpack.c.l.b16 %v139
    %v225 = vunpack.c.h.b16 %v139
    %v226 = vunpack.c.l.b16 %v140
    %v227 = vunpack.c.h.b16 %v140
    %v228 = vunpack.c.l.b16 %v141
    %v229 = vunpack.c.h.b16 %v141
    %v230 = vunpack.c.l.b16 %v142
    %v231 = vunpack.c.h.b16 %v142
    %v232 = vunpack.c.l.b16 %v143
    %v233 = vunpack.c.h.b16 %v143
    %v234 = vpack.c.b16 %v210, %v202
    %v235 = vpack.c.b16 %v211, %v203
    %v236 = vpack.c.b16 %v212, %v204
    %v237 = vpack.c.b16 %v213, %v205
    %v238 = vpack.c.b16 %v214, %v206
    %v239 = vpack.c.b16 %v215, %v207
    %v240 = vpack.c.b16 %v216, %v208
    %v241 = vpack.c.b16 %v217, %v209
    %v242 = vpack.c.b16 %v226, %v218
    %v243 = vpack.c.b16 %v227, %v219
    %v244 = vpack.c.b16 %v228, %v220
    %v245 = vpack.c.b16 %v229, %v221
    %v246 = vpack.c.b16 %v230, %v222
    %v247 = vpack.c.b16 %v231, %v223
    %v248 = vpack.c.b16 %v232, %v224
    %v249 = vpack.c.b16 %v233, %v225
    %vm266 = vcmask 261120
    %v268 = vsel %vm266, %v127, 0
    %270 = vmatprep.subr.bf16.mxu0 %v235
    %271 = vmatpush1.bf16.msra.mxu0 %v234
    %272 = vmatprep.subr.bf16.mxu0 %v243
    %273 = vmatpush1.bf16.msra.mxu0 %v242
    %274 = vmatprep.subr.bf16.mxu0 0
    %275 = vmatpush1.bf16.msra.mxu0 0
    %276 = vmatprep.subr.bf16.mxu0 0
    %277 = vmatpush1.bf16.msra.mxu0 0
    %278 = vmatprep.subr.bf16.mxu0 0
    %279 = vmatpush1.bf16.msra.mxu0 0
    %280 = vmatprep.subr.bf16.mxu0 0
    %281 = vmatpush1.bf16.msra.mxu0 0
    %282 = vmatprep.subr.bf16.mxu0 0
    %283 = vmatpush1.bf16.msra.mxu0 0
    %284 = vmatprep.subr.bf16.mxu0 0
    %285 = vmatpush1.bf16.msra.mxu0 0
    %286 = vmatprep.subr.bf16.mxu0 0
    %287 = vmatpush1.bf16.msra.mxu0 0
    %288 = vmatprep.subr.bf16.mxu0 0
    %289 = vmatpush1.bf16.msra.mxu0 0
    %290 = vmatprep.subr.bf16.mxu0 0
    %291 = vmatpush1.bf16.msra.mxu0 0
    %292 = vmatprep.subr.bf16.mxu0 0
    %293 = vmatpush1.bf16.msra.mxu0 0
    %294 = vmatprep.subr.bf16.mxu0 0
    %295 = vmatpush1.bf16.msra.mxu0 0
    %296 = vmatprep.subr.bf16.mxu0 0
    %297 = vmatpush1.bf16.msra.mxu0 0
    %298 = vmatprep.subr.bf16.mxu0 0
    %299 = vmatpush1.bf16.msra.mxu0 0
    %300 = vmatprep.subr.bf16.mxu0 0
    %301 = vmatpush1.bf16.msra.mxu0 0
    %302 = vmatprep.mubr.bf16.mxu0 0
    %303 = vmatmul.mubr.bf16.gmra.mrb[0].mxu0 %v268
    %v304 = vpop.f32.mrb[0].mxu0
    %v305 = vadd.f32 %v149, %v304
    %v306 = vpop.f32.mrb[0].mxu0
    %v307 = vadd.f32 %v153, %v306
    %v308 = vpop.f32.mrb[0].mxu0
    %v309 = vpop.f32.mrb[0].mxu0
    %310 = vdwg.mxu0
    %311 = vmatprep.subr.bf16.mxu0 %v237
    %312 = vmatpush1.bf16.msra.mxu0 %v236
    %313 = vmatprep.subr.bf16.mxu0 %v245
    %314 = vmatpush1.bf16.msra.mxu0 %v244
    %315 = vmatprep.subr.bf16.mxu0 0
    %316 = vmatpush1.bf16.msra.mxu0 0
    %317 = vmatprep.subr.bf16.mxu0 0
    %318 = vmatpush1.bf16.msra.mxu0 0
    %319 = vmatprep.subr.bf16.mxu0 0
    %320 = vmatpush1.bf16.msra.mxu0 0
    %321 = vmatprep.subr.bf16.mxu0 0
    %322 = vmatpush1.bf16.msra.mxu0 0
    %323 = vmatprep.subr.bf16.mxu0 0
    %324 = vmatpush1.bf16.msra.mxu0 0
    %325 = vmatprep.subr.bf16.mxu0 0
    %326 = vmatpush1.bf16.msra.mxu0 0
    %327 = vmatprep.subr.bf16.mxu0 0
    %328 = vmatpush1.bf16.msra.mxu0 0
    %329 = vmatprep.subr.bf16.mxu0 0
    %330 = vmatpush1.bf16.msra.mxu0 0
    %331 = vmatprep.subr.bf16.mxu0 0
    %332 = vmatpush1.bf16.msra.mxu0 0
    %333 = vmatprep.subr.bf16.mxu0 0
    %334 = vmatpush1.bf16.msra.mxu0 0
    %335 = vmatprep.subr.bf16.mxu0 0
    %336 = vmatpush1.bf16.msra.mxu0 0
    %337 = vmatprep.subr.bf16.mxu0 0
    %338 = vmatpush1.bf16.msra.mxu0 0
    %339 = vmatprep.subr.bf16.mxu0 0
    %340 = vmatpush1.bf16.msra.mxu0 0
    %341 = vmatprep.subr.bf16.mxu0 0
    %342 = vmatpush1.bf16.msra.mxu0 0
    %343 = vmatprep.mubr.bf16.mxu0 0
    %344 = vmatmul.mubr.bf16.gmra.mrb[0].mxu0 %v268
    %v345 = vpop.f32.mrb[0].mxu0
    %v346 = vadd.f32 %v157, %v345
    %v347 = vpop.f32.mrb[0].mxu0
    %v348 = vadd.f32 %v161, %v347
    %v349 = vpop.f32.mrb[0].mxu0
    %v350 = vpop.f32.mrb[0].mxu0
    %351 = vdwg.mxu0
    %352 = vmatprep.subr.bf16.mxu0 %v239
    %353 = vmatpush1.bf16.msra.mxu0 %v238
    %354 = vmatprep.subr.bf16.mxu0 %v247
    %355 = vmatpush1.bf16.msra.mxu0 %v246
    %356 = vmatprep.subr.bf16.mxu0 0
    %357 = vmatpush1.bf16.msra.mxu0 0
    %358 = vmatprep.subr.bf16.mxu0 0
    %359 = vmatpush1.bf16.msra.mxu0 0
    %360 = vmatprep.subr.bf16.mxu0 0
    %361 = vmatpush1.bf16.msra.mxu0 0
    %362 = vmatprep.subr.bf16.mxu0 0
    %363 = vmatpush1.bf16.msra.mxu0 0
    %364 = vmatprep.subr.bf16.mxu0 0
    %365 = vmatpush1.bf16.msra.mxu0 0
    %366 = vmatprep.subr.bf16.mxu0 0
    %367 = vmatpush1.bf16.msra.mxu0 0
    %368 = vmatprep.subr.bf16.mxu0 0
    %369 = vmatpush1.bf16.msra.mxu0 0
    %370 = vmatprep.subr.bf16.mxu0 0
    %371 = vmatpush1.bf16.msra.mxu0 0
    %372 = vmatprep.subr.bf16.mxu0 0
    %373 = vmatpush1.bf16.msra.mxu0 0
    %374 = vmatprep.subr.bf16.mxu0 0
    %375 = vmatpush1.bf16.msra.mxu0 0
    %376 = vmatprep.subr.bf16.mxu0 0
    %377 = vmatpush1.bf16.msra.mxu0 0
    %378 = vmatprep.subr.bf16.mxu0 0
    %379 = vmatpush1.bf16.msra.mxu0 0
    %380 = vmatprep.subr.bf16.mxu0 0
    %381 = vmatpush1.bf16.msra.mxu0 0
    %382 = vmatprep.subr.bf16.mxu0 0
    %383 = vmatpush1.bf16.msra.mxu0 0
    %384 = vmatprep.mubr.bf16.mxu0 0
    %385 = vmatmul.mubr.bf16.gmra.mrb[0].mxu0 %v268
    %v386 = vpop.f32.mrb[0].mxu0
    %v387 = vadd.f32 %v165, %v386
    %v388 = vpop.f32.mrb[0].mxu0
    %v389 = vadd.f32 %v169, %v388
    %v390 = vpop.f32.mrb[0].mxu0
    %v391 = vpop.f32.mrb[0].mxu0
    %392 = vdwg.mxu0
    %393 = vmatprep.subr.bf16.mxu0 %v241
    %394 = vmatpush1.bf16.msra.mxu0 %v240
    %395 = vmatprep.subr.bf16.mxu0 %v249
    %396 = vmatpush1.bf16.msra.mxu0 %v248
    %397 = vmatprep.subr.bf16.mxu0 0
    %398 = vmatpush1.bf16.msra.mxu0 0
    %399 = vmatprep.subr.bf16.mxu0 0
    %400 = vmatpush1.bf16.msra.mxu0 0
    %401 = vmatprep.subr.bf16.mxu0 0
    %402 = vmatpush1.bf16.msra.mxu0 0
    %403 = vmatprep.subr.bf16.mxu0 0
    %404 = vmatpush1.bf16.msra.mxu0 0
    %405 = vmatprep.subr.bf16.mxu0 0
    %406 = vmatpush1.bf16.msra.mxu0 0
    %407 = vmatprep.subr.bf16.mxu0 0
    %408 = vmatpush1.bf16.msra.mxu0 0
    %409 = vmatprep.subr.bf16.mxu0 0
    %410 = vmatpush1.bf16.msra.mxu0 0
    %411 = vmatprep.subr.bf16.mxu0 0
    %412 = vmatpush1.bf16.msra.mxu0 0
    %413 = vmatprep.subr.bf16.mxu0 0
    %414 = vmatpush1.bf16.msra.mxu0 0
    %415 = vmatprep.subr.bf16.mxu0 0
    %416 = vmatpush1.bf16.msra.mxu0 0
    %417 = vmatprep.subr.bf16.mxu0 0
    %418 = vmatpush1.bf16.msra.mxu0 0
    %419 = vmatprep.subr.bf16.mxu0 0
    %420 = vmatpush1.bf16.msra.mxu0 0
    %421 = vmatprep.subr.bf16.mxu0 0
    %422 = vmatpush1.bf16.msra.mxu0 0
    %423 = vmatprep.subr.bf16.mxu0 0
    %424 = vmatpush1.bf16.msra.mxu0 0
    %425 = vmatprep.mubr.bf16.mxu0 0
    %426 = vmatmul.mubr.bf16.gmra.mrb[0].mxu0 %v268
    %v427 = vpop.f32.mrb[0].mxu0
    %v428 = vadd.f32 %v173, %v427
    %v429 = vpop.f32.mrb[0].mxu0
    %v430 = vadd.f32 %v177, %v429
    %v431 = vpop.f32.mrb[0].mxu0
    %v432 = vpop.f32.mrb[0].mxu0
    %433 = vdwg.mxu0
    %v434 = vmax.f32 %v305, 0.0
    %v435 = vmax.f32 %v307, 0.0
    %v436 = vmax.f32 %v346, 0.0
    %v437 = vmax.f32 %v348, 0.0
    %v438 = vmax.f32 %v387, 0.0
    %v439 = vmax.f32 %v389, 0.0
    %v440 = vmax.f32 %v428, 0.0
    %v441 = vmax.f32 %v430, 0.0
    %s442 = smul.u32 4, 128
    %s443 = smul.u32 %s442, 4
    %s444 = sshll.u32 %s443, 4
    %445 = dma.done [#allocation5], %s444
    %v446 = vpack.c.bf16 %v434, %v434
    %v447 = vpack.c.bf16 %v435, %v435
    %v448 = vpack.c.bf16 %v436, %v436
    %v449 = vpack.c.bf16 %v437, %v437
    %v450 = vpack.c.bf16 %v438, %v438
    %v451 = vpack.c.bf16 %v439, %v439
    %v452 = vpack.c.bf16 %v440, %v440
    %v453 = vpack.c.bf16 %v441, %v441
    %v454 = vld [vmem:[#allocation2] sm:$0xff]
    %v455 = vld [vmem:[#allocation2 + $0x8] sm:$0xff]
    %v456 = vld [vmem:[#allocation2 + $0x10] sm:$0xff]
    %v457 = vld [vmem:[#allocation2 + $0x18] sm:$0xff]
    %v458 = vld [vmem:[#allocation2 + $0x20] sm:$0xff]
    %v459 = vld [vmem:[#allocation2 + $0x28] sm:$0xff]
    %v460 = vld [vmem:[#allocation2 + $0x30] sm:$0xff]
    %v461 = vld [vmem:[#allocation2 + $0x38] sm:$0xff]
    %v462 = vld [vmem:[#allocation2 + $0x40] sm:$0xff]
    %v463 = vld [vmem:[#allocation2 + $0x48] sm:$0xff]
    %v464 = vld [vmem:[#allocation2 + $0x50] sm:$0xff]
    %v465 = vld [vmem:[#allocation2 + $0x58] sm:$0xff]
    %v466 = vld [vmem:[#allocation2 + $0x60] sm:$0xff]
    %v467 = vld [vmem:[#allocation2 + $0x68] sm:$0xff]
    %v468 = vld [vmem:[#allocation2 + $0x70] sm:$0xff]
    %v469 = vld [vmem:[#allocation2 + $0x78] sm:$0xff]
    %v470 = vld [vmem:[#allocation2 + $0x80] sm:$0xff]
    %v471 = vld [vmem:[#allocation2 + $0x88] sm:$0xff]
    %v472 = vld [vmem:[#allocation2 + $0x90] sm:$0xff]
    %v473 = vld [vmem:[#allocation2 + $0x98] sm:$0xff]
    %v474 = vld [vmem:[#allocation2 + $0xa0] sm:$0xff]
    %v475 = vld [vmem:[#allocation2 + $0xa8] sm:$0xff]
    %v476 = vld [vmem:[#allocation2 + $0xb0] sm:$0xff]
    %v477 = vld [vmem:[#allocation2 + $0xb8] sm:$0xff]
    %v478 = vld [vmem:[#allocation2 + $0xc0] sm:$0xff]
    %v479 = vld [vmem:[#allocation2 + $0xc8] sm:$0xff]
    %v480 = vld [vmem:[#allocation2 + $0xd0] sm:$0xff]
    %v481 = vld [vmem:[#allocation2 + $0xd8] sm:$0xff]
    %v482 = vld [vmem:[#allocation2 + $0xe0] sm:$0xff]
    %v483 = vld [vmem:[#allocation2 + $0xe8] sm:$0xff]
    %v484 = vld [vmem:[#allocation2 + $0xf0] sm:$0xff]
    %v485 = vld [vmem:[#allocation2 + $0xf8] sm:$0xff]
    %v486 = vld [vmem:[#allocation2 + $0x100] sm:$0xff]
    %v487 = vld [vmem:[#allocation2 + $0x108] sm:$0xff]
    %v488 = vld [vmem:[#allocation2 + $0x110] sm:$0xff]
    %v489 = vld [vmem:[#allocation2 + $0x118] sm:$0xff]
    %v490 = vld [vmem:[#allocation2 + $0x120] sm:$0xff]
    %v491 = vld [vmem:[#allocation2 + $0x128] sm:$0xff]
    %v492 = vld [vmem:[#allocation2 + $0x130] sm:$0xff]
    %v493 = vld [vmem:[#allocation2 + $0x138] sm:$0xff]
    %v494 = vld [vmem:[#allocation2 + $0x140] sm:$0xff]
    %v495 = vld [vmem:[#allocation2 + $0x148] sm:$0xff]
    %v496 = vld [vmem:[#allocation2 + $0x150] sm:$0xff]
    %v497 = vld [vmem:[#allocation2 + $0x158] sm:$0xff]
    %v498 = vld [vmem:[#allocation2 + $0x160] sm:$0xff]
    %v499 = vld [vmem:[#allocation2 + $0x168] sm:$0xff]
    %v500 = vld [vmem:[#allocation2 + $0x170] sm:$0xff]
    %v501 = vld [vmem:[#allocation2 + $0x178] sm:$0xff]
    %v502 = vld [vmem:[#allocation2 + $0x180] sm:$0xff]
    %v503 = vld [vmem:[#allocation2 + $0x188] sm:$0xff]
    %v504 = vld [vmem:[#allocation2 + $0x190] sm:$0xff]
    %v505 = vld [vmem:[#allocation2 + $0x198] sm:$0xff]
    %v506 = vld [vmem:[#allocation2 + $0x1a0] sm:$0xff]
    %v507 = vld [vmem:[#allocation2 + $0x1a8] sm:$0xff]
    %v508 = vld [vmem:[#allocation2 + $0x1b0] sm:$0xff]
    %v509 = vld [vmem:[#allocation2 + $0x1b8] sm:$0xff]
    %v510 = vld [vmem:[#allocation2 + $0x1c0] sm:$0xff]
    %v511 = vld [vmem:[#allocation2 + $0x1c8] sm:$0xff]
    %v512 = vld [vmem:[#allocation2 + $0x1d0] sm:$0xff]
    %v513 = vld [vmem:[#allocation2 + $0x1d8] sm:$0xff]
    %v514 = vld [vmem:[#allocation2 + $0x1e0] sm:$0xff]
    %v515 = vld [vmem:[#allocation2 + $0x1e8] sm:$0xff]
    %v516 = vld [vmem:[#allocation2 + $0x1f0] sm:$0xff]
    %v517 = vld [vmem:[#allocation2 + $0x1f8] sm:$0xff]
    %v518 = vld [vmem:[#allocation2 + $0x200] sm:$0xff]
    %v519 = vld [vmem:[#allocation2 + $0x208] sm:$0xff]
    %v520 = vld [vmem:[#allocation2 + $0x210] sm:$0xff]
    %v521 = vld [vmem:[#allocation2 + $0x218] sm:$0xff]
    %v522 = vld [vmem:[#allocation2 + $0x220] sm:$0xff]
    %v523 = vld [vmem:[#allocation2 + $0x228] sm:$0xff]
    %v524 = vld [vmem:[#allocation2 + $0x230] sm:$0xff]
    %v525 = vld [vmem:[#allocation2 + $0x238] sm:$0xff]
    %v526 = vld [vmem:[#allocation2 + $0x240] sm:$0xff]
    %v527 = vld [vmem:[#allocation2 + $0x248] sm:$0xff]
    %v528 = vld [vmem:[#allocation2 + $0x250] sm:$0xff]
    %v529 = vld [vmem:[#allocation2 + $0x258] sm:$0xff]
    %v530 = vld [vmem:[#allocation2 + $0x260] sm:$0xff]
    %v531 = vld [vmem:[#allocation2 + $0x268] sm:$0xff]
    %v532 = vld [vmem:[#allocation2 + $0x270] sm:$0xff]
    %v533 = vld [vmem:[#allocation2 + $0x278] sm:$0xff]
    %v534 = vld [vmem:[#allocation2 + $0x280] sm:$0xff]
    %v535 = vld [vmem:[#allocation2 + $0x288] sm:$0xff]
    %v536 = vld [vmem:[#allocation2 + $0x290] sm:$0xff]
    %v537 = vld [vmem:[#allocation2 + $0x298] sm:$0xff]
    %v538 = vld [vmem:[#allocation2 + $0x2a0] sm:$0xff]
    %v539 = vld [vmem:[#allocation2 + $0x2a8] sm:$0xff]
    %v540 = vld [vmem:[#allocation2 + $0x2b0] sm:$0xff]
    %v541 = vld [vmem:[#allocation2 + $0x2b8] sm:$0xff]
    %v542 = vld [vmem:[#allocation2 + $0x2c0] sm:$0xff]
    %v543 = vld [vmem:[#allocation2 + $0x2c8] sm:$0xff]
    %v544 = vld [vmem:[#allocation2 + $0x2d0] sm:$0xff]
    %v545 = vld [vmem:[#allocation2 + $0x2d8] sm:$0xff]
    %v546 = vld [vmem:[#allocation2 + $0x2e0] sm:$0xff]
    %v547 = vld [vmem:[#allocation2 + $0x2e8] sm:$0xff]
    %v548 = vld [vmem:[#allocation2 + $0x2f0] sm:$0xff]
    %v549 = vld [vmem:[#allocation2 + $0x2f8] sm:$0xff]
    %v550 = vld [vmem:[#allocation2 + $0x300] sm:$0xff]
    %v551 = vld [vmem:[#allocation2 + $0x308] sm:$0xff]
    %v552 = vld [vmem:[#allocation2 + $0x310] sm:$0xff]
    %v553 = vld [vmem:[#allocation2 + $0x318] sm:$0xff]
    %v554 = vld [vmem:[#allocation2 + $0x320] sm:$0xff]
    %v555 = vld [vmem:[#allocation2 + $0x328] sm:$0xff]
    %v556 = vld [vmem:[#allocation2 + $0x330] sm:$0xff]
    %v557 = vld [vmem:[#allocation2 + $0x338] sm:$0xff]
    %v558 = vld [vmem:[#allocation2 + $0x340] sm:$0xff]
    %v559 = vld [vmem:[#allocation2 + $0x348] sm:$0xff]
    %v560 = vld [vmem:[#allocation2 + $0x350] sm:$0xff]
    %v561 = vld [vmem:[#allocation2 + $0x358] sm:$0xff]
    %v562 = vld [vmem:[#allocation2 + $0x360] sm:$0xff]
    %v563 = vld [vmem:[#allocation2 + $0x368] sm:$0xff]
    %v564 = vld [vmem:[#allocation2 + $0x370] sm:$0xff]
    %v565 = vld [vmem:[#allocation2 + $0x378] sm:$0xff]
    %v566 = vld [vmem:[#allocation2 + $0x380] sm:$0xff]
    %v567 = vld [vmem:[#allocation2 + $0x388] sm:$0xff]
    %v568 = vld [vmem:[#allocation2 + $0x390] sm:$0xff]
    %v569 = vld [vmem:[#allocation2 + $0x398] sm:$0xff]
    %v570 = vld [vmem:[#allocation2 + $0x3a0] sm:$0xff]
    %v571 = vld [vmem:[#allocation2 + $0x3a8] sm:$0xff]
    %v572 = vld [vmem:[#allocation2 + $0x3b0] sm:$0xff]
    %v573 = vld [vmem:[#allocation2 + $0x3b8] sm:$0xff]
    %v574 = vld [vmem:[#allocation2 + $0x3c0] sm:$0xff]
    %v575 = vld [vmem:[#allocation2 + $0x3c8] sm:$0xff]
    %v576 = vld [vmem:[#allocation2 + $0x3d0] sm:$0xff]
    %v577 = vld [vmem:[#allocation2 + $0x3d8] sm:$0xff]
    %v578 = vld [vmem:[#allocation2 + $0x3e0] sm:$0xff]
    %v579 = vld [vmem:[#allocation2 + $0x3e8] sm:$0xff]
    %v580 = vld [vmem:[#allocation2 + $0x3f0] sm:$0xff]
    %v581 = vld [vmem:[#allocation2 + $0x3f8] sm:$0xff]
    %v582 = vld [vmem:[#allocation2 + $0x400] sm:$0xff]
    %v583 = vld [vmem:[#allocation2 + $0x408] sm:$0xff]
    %v584 = vld [vmem:[#allocation2 + $0x410] sm:$0xff]
    %v585 = vld [vmem:[#allocation2 + $0x418] sm:$0xff]
    %v586 = vld [vmem:[#allocation2 + $0x420] sm:$0xff]
    %v587 = vld [vmem:[#allocation2 + $0x428] sm:$0xff]
    %v588 = vld [vmem:[#allocation2 + $0x430] sm:$0xff]
    %v589 = vld [vmem:[#allocation2 + $0x438] sm:$0xff]
    %v590 = vld [vmem:[#allocation2 + $0x440] sm:$0xff]
    %v591 = vld [vmem:[#allocation2 + $0x448] sm:$0xff]
    %v592 = vld [vmem:[#allocation2 + $0x450] sm:$0xff]
    %v593 = vld [vmem:[#allocation2 + $0x458] sm:$0xff]
    %v594 = vld [vmem:[#allocation2 + $0x460] sm:$0xff]
    %v595 = vld [vmem:[#allocation2 + $0x468] sm:$0xff]
    %v596 = vld [vmem:[#allocation2 + $0x470] sm:$0xff]
    %v597 = vld [vmem:[#allocation2 + $0x478] sm:$0xff]
    %v598 = vld [vmem:[#allocation2 + $0x480] sm:$0xff]
    %v599 = vld [vmem:[#allocation2 + $0x488] sm:$0xff]
    %v600 = vld [vmem:[#allocation2 + $0x490] sm:$0xff]
    %v601 = vld [vmem:[#allocation2 + $0x498] sm:$0xff]
    %v602 = vld [vmem:[#allocation2 + $0x4a0] sm:$0xff]
    %v603 = vld [vmem:[#allocation2 + $0x4a8] sm:$0xff]
    %v604 = vld [vmem:[#allocation2 + $0x4b0] sm:$0xff]
    %v605 = vld [vmem:[#allocation2 + $0x4b8] sm:$0xff]
    %v606 = vld [vmem:[#allocation2 + $0x4c0] sm:$0xff]
    %v607 = vld [vmem:[#allocation2 + $0x4c8] sm:$0xff]
    %v608 = vld [vmem:[#allocation2 + $0x4d0] sm:$0xff]
    %v609 = vld [vmem:[#allocation2 + $0x4d8] sm:$0xff]
    %v610 = vld [vmem:[#allocation2 + $0x4e0] sm:$0xff]
    %v611 = vld [vmem:[#allocation2 + $0x4e8] sm:$0xff]
    %v612 = vld [vmem:[#allocation2 + $0x4f0] sm:$0xff]
    %v613 = vld [vmem:[#allocation2 + $0x4f8] sm:$0xff]
    %v614 = vld [vmem:[#allocation2 + $0x500] sm:$0xff]
    %v615 = vld [vmem:[#allocation2 + $0x508] sm:$0xff]
    %v616 = vld [vmem:[#allocation2 + $0x510] sm:$0xff]
    %v617 = vld [vmem:[#allocation2 + $0x518] sm:$0xff]
    %v618 = vld [vmem:[#allocation2 + $0x520] sm:$0xff]
    %v619 = vld [vmem:[#allocation2 + $0x528] sm:$0xff]
    %v620 = vld [vmem:[#allocation2 + $0x530] sm:$0xff]
    %v621 = vld [vmem:[#allocation2 + $0x538] sm:$0xff]
    %v622 = vld [vmem:[#allocation2 + $0x540] sm:$0xff]
    %v623 = vld [vmem:[#allocation2 + $0x548] sm:$0xff]
    %v624 = vld [vmem:[#allocation2 + $0x550] sm:$0xff]
    %v625 = vld [vmem:[#allocation2 + $0x558] sm:$0xff]
    %v626 = vld [vmem:[#allocation2 + $0x560] sm:$0xff]
    %v627 = vld [vmem:[#allocation2 + $0x568] sm:$0xff]
    %v628 = vld [vmem:[#allocation2 + $0x570] sm:$0xff]
    %v629 = vld [vmem:[#allocation2 + $0x578] sm:$0xff]
    %v630 = vld [vmem:[#allocation2 + $0x580] sm:$0xff]
    %v631 = vld [vmem:[#allocation2 + $0x588] sm:$0xff]
    %v632 = vld [vmem:[#allocation2 + $0x590] sm:$0xff]
    %v633 = vld [vmem:[#allocation2 + $0x598] sm:$0xff]
    %v634 = vld [vmem:[#allocation2 + $0x5a0] sm:$0xff]
    %v635 = vld [vmem:[#allocation2 + $0x5a8] sm:$0xff]
    %v636 = vld [vmem:[#allocation2 + $0x5b0] sm:$0xff]
    %v637 = vld [vmem:[#allocation2 + $0x5b8] sm:$0xff]
    %v638 = vld [vmem:[#allocation2 + $0x5c0] sm:$0xff]
    %v639 = vld [vmem:[#allocation2 + $0x5c8] sm:$0xff]
    %v640 = vld [vmem:[#allocation2 + $0x5d0] sm:$0xff]
    %v641 = vld [vmem:[#allocation2 + $0x5d8] sm:$0xff]
    %v642 = vld [vmem:[#allocation2 + $0x5e0] sm:$0xff]
    %v643 = vld [vmem:[#allocation2 + $0x5e8] sm:$0xff]
    %v644 = vld [vmem:[#allocation2 + $0x5f0] sm:$0xff]
    %v645 = vld [vmem:[#allocation2 + $0x5f8] sm:$0xff]
    %v646 = vld [vmem:[#allocation2 + $0x600] sm:$0xff]
    %v647 = vld [vmem:[#allocation2 + $0x608] sm:$0xff]
    %v648 = vld [vmem:[#allocation2 + $0x610] sm:$0xff]
    %v649 = vld [vmem:[#allocation2 + $0x618] sm:$0xff]
    %v650 = vld [vmem:[#allocation2 + $0x620] sm:$0xff]
    %v651 = vld [vmem:[#allocation2 + $0x628] sm:$0xff]
    %v652 = vld [vmem:[#allocation2 + $0x630] sm:$0xff]
    %v653 = vld [vmem:[#allocation2 + $0x638] sm:$0xff]
    %v654 = vld [vmem:[#allocation2 + $0x640] sm:$0xff]
    %v655 = vld [vmem:[#allocation2 + $0x648] sm:$0xff]
    %v656 = vld [vmem:[#allocation2 + $0x650] sm:$0xff]
    %v657 = vld [vmem:[#allocation2 + $0x658] sm:$0xff]
    %v658 = vld [vmem:[#allocation2 + $0x660] sm:$0xff]
    %v659 = vld [vmem:[#allocation2 + $0x668] sm:$0xff]
    %v660 = vld [vmem:[#allocation2 + $0x670] sm:$0xff]
    %v661 = vld [vmem:[#allocation2 + $0x678] sm:$0xff]
    %v662 = vld [vmem:[#allocation2 + $0x680] sm:$0xff]
    %v663 = vld [vmem:[#allocation2 + $0x688] sm:$0xff]
    %v664 = vld [vmem:[#allocation2 + $0x690] sm:$0xff]
    %v665 = vld [vmem:[#allocation2 + $0x698] sm:$0xff]
    %v666 = vld [vmem:[#allocation2 + $0x6a0] sm:$0xff]
    %v667 = vld [vmem:[#allocation2 + $0x6a8] sm:$0xff]
    %v668 = vld [vmem:[#allocation2 + $0x6b0] sm:$0xff]
    %v669 = vld [vmem:[#allocation2 + $0x6b8] sm:$0xff]
    %v670 = vld [vmem:[#allocation2 + $0x6c0] sm:$0xff]
    %v671 = vld [vmem:[#allocation2 + $0x6c8] sm:$0xff]
    %v672 = vld [vmem:[#allocation2 + $0x6d0] sm:$0xff]
    %v673 = vld [vmem:[#allocation2 + $0x6d8] sm:$0xff]
    %v674 = vld [vmem:[#allocation2 + $0x6e0] sm:$0xff]
    %v675 = vld [vmem:[#allocation2 + $0x6e8] sm:$0xff]
    %v676 = vld [vmem:[#allocation2 + $0x6f0] sm:$0xff]
    %v677 = vld [vmem:[#allocation2 + $0x6f8] sm:$0xff]
    %v678 = vld [vmem:[#allocation2 + $0x700] sm:$0xff]
    %v679 = vld [vmem:[#allocation2 + $0x708] sm:$0xff]
    %v680 = vld [vmem:[#allocation2 + $0x710] sm:$0xff]
    %v681 = vld [vmem:[#allocation2 + $0x718] sm:$0xff]
    %v682 = vld [vmem:[#allocation2 + $0x720] sm:$0xff]
    %v683 = vld [vmem:[#allocation2 + $0x728] sm:$0xff]
    %v684 = vld [vmem:[#allocation2 + $0x730] sm:$0xff]
    %v685 = vld [vmem:[#allocation2 + $0x738] sm:$0xff]
    %v686 = vld [vmem:[#allocation2 + $0x740] sm:$0xff]
    %v687 = vld [vmem:[#allocation2 + $0x748] sm:$0xff]
    %v688 = vld [vmem:[#allocation2 + $0x750] sm:$0xff]
    %v689 = vld [vmem:[#allocation2 + $0x758] sm:$0xff]
    %v690 = vld [vmem:[#allocation2 + $0x760] sm:$0xff]
    %v691 = vld [vmem:[#allocation2 + $0x768] sm:$0xff]
    %v692 = vld [vmem:[#allocation2 + $0x770] sm:$0xff]
    %v693 = vld [vmem:[#allocation2 + $0x778] sm:$0xff]
    %v694 = vld [vmem:[#allocation2 + $0x780] sm:$0xff]
    %v695 = vld [vmem:[#allocation2 + $0x788] sm:$0xff]
    %v696 = vld [vmem:[#allocation2 + $0x790] sm:$0xff]
    %v697 = vld [vmem:[#allocation2 + $0x798] sm:$0xff]
    %v698 = vld [vmem:[#allocation2 + $0x7a0] sm:$0xff]
    %v699 = vld [vmem:[#allocation2 + $0x7a8] sm:$0xff]
    %v700 = vld [vmem:[#allocation2 + $0x7b0] sm:$0xff]
    %v701 = vld [vmem:[#allocation2 + $0x7b8] sm:$0xff]
    %v702 = vld [vmem:[#allocation2 + $0x7c0] sm:$0xff]
    %v703 = vld [vmem:[#allocation2 + $0x7c8] sm:$0xff]
    %v704 = vld [vmem:[#allocation2 + $0x7d0] sm:$0xff]
    %v705 = vld [vmem:[#allocation2 + $0x7d8] sm:$0xff]
    %v706 = vld [vmem:[#allocation2 + $0x7e0] sm:$0xff]
    %v707 = vld [vmem:[#allocation2 + $0x7e8] sm:$0xff]
    %v708 = vld [vmem:[#allocation2 + $0x7f0] sm:$0xff]
    %v709 = vld [vmem:[#allocation2 + $0x7f8] sm:$0xff]
    %v710 = vld [vmem:[%s5 + $0x8] sm:$0xf]
    %v712 = vlaneseq
    %v713 = vshrl.u32 %v712, 7
    %v714 = vsub.s32 0, %v713
    %v715 = vrot.slane %v710, %v714
    %v716 = vlaneseq
    %v717 = vshrl.u32 %v716, 7
    %v718 = vsub.s32 1, %v717
    %v719 = vrot.slane %v710, %v718
    %v720 = vlaneseq
    %v721 = vshrl.u32 %v720, 7
    %v722 = vsub.s32 2, %v721
    %v723 = vrot.slane %v710, %v722
    %v724 = vlaneseq
    %v725 = vshrl.u32 %v724, 7
    %v726 = vsub.s32 3, %v725
    %v727 = vrot.slane %v710, %v726
    %732 = vmatprep.subr.bf16.mxu0 %v455
    %733 = vmatpush1.bf16.msra.mxu0 %v454
    %734 = vmatprep.subr.bf16.mxu0 %v459
    %735 = vmatpush1.bf16.msra.mxu0 %v458
    %736 = vmatprep.subr.bf16.mxu0 %v463
    %737 = vmatpush1.bf16.msra.mxu0 %v462
    %738 = vmatprep.subr.bf16.mxu0 %v467
    %739 = vmatpush1.bf16.msra.mxu0 %v466
    %740 = vmatprep.subr.bf16.mxu0 %v471
    %741 = vmatpush1.bf16.msra.mxu0 %v470
    %742 = vmatprep.subr.bf16.mxu0 %v475
    %743 = vmatpush1.bf16.msra.mxu0 %v474
    %744 = vmatprep.subr.bf16.mxu0 %v479
    %745 = vmatpush1.bf16.msra.mxu0 %v478
    %746 = vmatprep.subr.bf16.mxu0 %v483
    %747 = vmatpush1.bf16.msra.mxu0 %v482
    %748 = vmatprep.subr.bf16.mxu0 %v487
    %749 = vmatpush1.bf16.msra.mxu0 %v486
    %750 = vmatprep.subr.bf16.mxu0 %v491
    %751 = vmatpush1.bf16.msra.mxu0 %v490
    %752 = vmatprep.subr.bf16.mxu0 %v495
    %753 = vmatpush1.bf16.msra.mxu0 %v494
    %754 = vmatprep.subr.bf16.mxu0 %v499
    %755 = vmatpush1.bf16.msra.mxu0 %v498
    %756 = vmatprep.subr.bf16.mxu0 %v503
    %757 = vmatpush1.bf16.msra.mxu0 %v502
    %758 = vmatprep.subr.bf16.mxu0 %v507
    %759 = vmatpush1.bf16.msra.mxu0 %v506
    %760 = vmatprep.subr.bf16.mxu0 %v511
    %761 = vmatpush1.bf16.msra.mxu0 %v510
    %762 = vmatprep.subr.bf16.mxu0 %v515
    %763 = vmatpush1.bf16.msra.mxu0 %v514
    %764 = vmatprep.mubr.bf16.mxu0 %v447
    %765 = vmatmul.mubr.bf16.gmra.mrb[0].mxu0 %v446
    %v766 = vpop.f32.mrb[0].mxu0
    %v767 = vadd.f32 %v715, %v766
    %v768 = vpop.f32.mrb[0].mxu0
    %v769 = vadd.f32 %v719, %v768
    %v770 = vpop.f32.mrb[0].mxu0
    %v771 = vpop.f32.mrb[0].mxu0
    %772 = vdwg.mxu0
    %773 = vmatprep.subr.bf16.mxu0 %v519
    %774 = vmatpush1.bf16.msra.mxu0 %v518
    %775 = vmatprep.subr.bf16.mxu0 %v523
    %776 = vmatpush1.bf16.msra.mxu0 %v522
    %777 = vmatprep.subr.bf16.mxu0 %v527
    %778 = vmatpush1.bf16.msra.mxu0 %v526
    %779 = vmatprep.subr.bf16.mxu0 %v531
    %780 = vmatpush1.bf16.msra.mxu0 %v530
    %781 = vmatprep.subr.bf16.mxu0 %v535
    %782 = vmatpush1.bf16.msra.mxu0 %v534
    %783 = vmatprep.subr.bf16.mxu0 %v539
    %784 = vmatpush1.bf16.msra.mxu0 %v538
    %785 = vmatprep.subr.bf16.mxu0 %v543
    %786 = vmatpush1.bf16.msra.mxu0 %v542
    %787 = vmatprep.subr.bf16.mxu0 %v547
    %788 = vmatpush1.bf16.msra.mxu0 %v546
    %789 = vmatprep.subr.bf16.mxu0 %v551
    %790 = vmatpush1.bf16.msra.mxu0 %v550
    %791 = vmatprep.subr.bf16.mxu0 %v555
    %792 = vmatpush1.bf16.msra.mxu0 %v554
    %793 = vmatprep.subr.bf16.mxu0 %v559
    %794 = vmatpush1.bf16.msra.mxu0 %v558
    %795 = vmatprep.subr.bf16.mxu0 %v563
    %796 = vmatpush1.bf16.msra.mxu0 %v562
    %797 = vmatprep.subr.bf16.mxu0 %v567
    %798 = vmatpush1.bf16.msra.mxu0 %v566
    %799 = vmatprep.subr.bf16.mxu0 %v571
    %800 = vmatpush1.bf16.msra.mxu0 %v570
    %801 = vmatprep.subr.bf16.mxu0 %v575
    %802 = vmatpush1.bf16.msra.mxu0 %v574
    %803 = vmatprep.subr.bf16.mxu0 %v579
    %804 = vmatpush1.bf16.msra.mxu0 %v578
    %805 = vmatprep.mubr.bf16.mxu0 %v449
    %806 = vmatmul.mubr.bf16.gmra.mrb[0].mxu0 %v448
    %v807 = vpop.f32.mrb[0].mxu0
    %v808 = vadd.f32 %v767, %v807
    %v809 = vpop.f32.mrb[0].mxu0
    %v810 = vadd.f32 %v769, %v809
    %v811 = vpop.f32.mrb[0].mxu0
    %v812 = vpop.f32.mrb[0].mxu0
    %813 = vdwg.mxu0
    %814 = vmatprep.subr.bf16.mxu0 %v583
    %815 = vmatpush1.bf16.msra.mxu0 %v582
    %816 = vmatprep.subr.bf16.mxu0 %v587
    %817 = vmatpush1.bf16.msra.mxu0 %v586
    %818 = vmatprep.subr.bf16.mxu0 %v591
    %819 = vmatpush1.bf16.msra.mxu0 %v590
    %820 = vmatprep.subr.bf16.mxu0 %v595
    %821 = vmatpush1.bf16.msra.mxu0 %v594
    %822 = vmatprep.subr.bf16.mxu0 %v599
    %823 = vmatpush1.bf16.msra.mxu0 %v598
    %824 = vmatprep.subr.bf16.mxu0 %v603
    %825 = vmatpush1.bf16.msra.mxu0 %v602
    %826 = vmatprep.subr.bf16.mxu0 %v607
    %827 = vmatpush1.bf16.msra.mxu0 %v606
    %828 = vmatprep.subr.bf16.mxu0 %v611
    %829 = vmatpush1.bf16.msra.mxu0 %v610
    %830 = vmatprep.subr.bf16.mxu0 %v615
    %831 = vmatpush1.bf16.msra.mxu0 %v614
    %832 = vmatprep.subr.bf16.mxu0 %v619
    %833 = vmatpush1.bf16.msra.mxu0 %v618
    %834 = vmatprep.subr.bf16.mxu0 %v623
    %835 = vmatpush1.bf16.msra.mxu0 %v622
    %836 = vmatprep.subr.bf16.mxu0 %v627
    %837 = vmatpush1.bf16.msra.mxu0 %v626
    %838 = vmatprep.subr.bf16.mxu0 %v631
    %839 = vmatpush1.bf16.msra.mxu0 %v630
    %840 = vmatprep.subr.bf16.mxu0 %v635
    %841 = vmatpush1.bf16.msra.mxu0 %v634
    %842 = vmatprep.subr.bf16.mxu0 %v639
    %843 = vmatpush1.bf16.msra.mxu0 %v638
    %844 = vmatprep.subr.bf16.mxu0 %v643
    %845 = vmatpush1.bf16.msra.mxu0 %v642
    %846 = vmatprep.mubr.bf16.mxu0 %v451
    %847 = vmatmul.mubr.bf16.gmra.mrb[0].mxu0 %v450
    %v848 = vpop.f32.mrb[0].mxu0
    %v849 = vadd.f32 %v808, %v848
    %v850 = vpop.f32.mrb[0].mxu0
    %v851 = vadd.f32 %v810, %v850
    %v852 = vpop.f32.mrb[0].mxu0
    %v853 = vpop.f32.mrb[0].mxu0
    %854 = vdwg.mxu0
    %855 = vmatprep.subr.bf16.mxu0 %v647
    %856 = vmatpush1.bf16.msra.mxu0 %v646
    %857 = vmatprep.subr.bf16.mxu0 %v651
    %858 = vmatpush1.bf16.msra.mxu0 %v650
    %859 = vmatprep.subr.bf16.mxu0 %v655
    %860 = vmatpush1.bf16.msra.mxu0 %v654
    %861 = vmatprep.subr.bf16.mxu0 %v659
    %862 = vmatpush1.bf16.msra.mxu0 %v658
    %863 = vmatprep.subr.bf16.mxu0 %v663
    %864 = vmatpush1.bf16.msra.mxu0 %v662
    %865 = vmatprep.subr.bf16.mxu0 %v667
    %866 = vmatpush1.bf16.msra.mxu0 %v666
    %867 = vmatprep.subr.bf16.mxu0 %v671
    %868 = vmatpush1.bf16.msra.mxu0 %v670
    %869 = vmatprep.subr.bf16.mxu0 %v675
    %870 = vmatpush1.bf16.msra.mxu0 %v674
    %871 = vmatprep.subr.bf16.mxu0 %v679
    %872 = vmatpush1.bf16.msra.mxu0 %v678
    %873 = vmatprep.subr.bf16.mxu0 %v683
    %874 = vmatpush1.bf16.msra.mxu0 %v682
    %875 = vmatprep.subr.bf16.mxu0 %v687
    %876 = vmatpush1.bf16.msra.mxu0 %v686
    %877 = vmatprep.subr.bf16.mxu0 %v691
    %878 = vmatpush1.bf16.msra.mxu0 %v690
    %879 = vmatprep.subr.bf16.mxu0 %v695
    %880 = vmatpush1.bf16.msra.mxu0 %v694
    %881 = vmatprep.subr.bf16.mxu0 %v699
    %882 = vmatpush1.bf16.msra.mxu0 %v698
    %883 = vmatprep.subr.bf16.mxu0 %v703
    %884 = vmatpush1.bf16.msra.mxu0 %v702
    %885 = vmatprep.subr.bf16.mxu0 %v707
    %886 = vmatpush1.bf16.msra.mxu0 %v706
    %887 = vmatprep.mubr.bf16.mxu0 %v453
    %888 = vmatmul.mubr.bf16.gmra.mrb[0].mxu0 %v452
    %v889 = vpop.f32.mrb[0].mxu0
    %v890 = vadd.f32 %v849, %v889
    %v891 = vpop.f32.mrb[0].mxu0
    %v892 = vadd.f32 %v851, %v891
    %v893 = vpop.f32.mrb[0].mxu0
    %v894 = vpop.f32.mrb[0].mxu0
    %895 = vdwg.mxu0
    %896 = vmatprep.subr.bf16.mxu0 %v457
    %897 = vmatpush1.bf16.msra.mxu0 %v456
    %898 = vmatprep.subr.bf16.mxu0 %v461
    %899 = vmatpush1.bf16.msra.mxu0 %v460
    %900 = vmatprep.subr.bf16.mxu0 %v465
    %901 = vmatpush1.bf16.msra.mxu0 %v464
    %902 = vmatprep.subr.bf16.mxu0 %v469
    %903 = vmatpush1.bf16.msra.mxu0 %v468
    %904 = vmatprep.subr.bf16.mxu0 %v473
    %905 = vmatpush1.bf16.msra.mxu0 %v472
    %906 = vmatprep.subr.bf16.mxu0 %v477
    %907 = vmatpush1.bf16.msra.mxu0 %v476
    %908 = vmatprep.subr.bf16.mxu0 %v481
    %909 = vmatpush1.bf16.msra.mxu0 %v480
    %910 = vmatprep.subr.bf16.mxu0 %v485
    %911 = vmatpush1.bf16.msra.mxu0 %v484
    %912 = vmatprep.subr.bf16.mxu0 %v489
    %913 = vmatpush1.bf16.msra.mxu0 %v488
    %914 = vmatprep.subr.bf16.mxu0 %v493
    %915 = vmatpush1.bf16.msra.mxu0 %v492
    %916 = vmatprep.subr.bf16.mxu0 %v497
    %917 = vmatpush1.bf16.msra.mxu0 %v496
    %918 = vmatprep.subr.bf16.mxu0 %v501
    %919 = vmatpush1.bf16.msra.mxu0 %v500
    %920 = vmatprep.subr.bf16.mxu0 %v505
    %921 = vmatpush1.bf16.msra.mxu0 %v504
    %922 = vmatprep.subr.bf16.mxu0 %v509
    %923 = vmatpush1.bf16.msra.mxu0 %v508
    %924 = vmatprep.subr.bf16.mxu0 %v513
    %925 = vmatpush1.bf16.msra.mxu0 %v512
    %926 = vmatprep.subr.bf16.mxu0 %v517
    %927 = vmatpush1.bf16.msra.mxu0 %v516
    %928 = vmatprep.mubr.bf16.mxu0 %v447
    %929 = vmatmul.mubr.bf16.gmra.mrb[0].mxu0 %v446
    %v930 = vpop.f32.mrb[0].mxu0
    %v931 = vadd.f32 %v723, %v930
    %v932 = vpop.f32.mrb[0].mxu0
    %v933 = vadd.f32 %v727, %v932
    %v934 = vpop.f32.mrb[0].mxu0
    %v935 = vpop.f32.mrb[0].mxu0
    %936 = vdwg.mxu0
    %937 = vmatprep.subr.bf16.mxu0 %v521
    %938 = vmatpush1.bf16.msra.mxu0 %v520
    %939 = vmatprep.subr.bf16.mxu0 %v525
    %940 = vmatpush1.bf16.msra.mxu0 %v524
    %941 = vmatprep.subr.bf16.mxu0 %v529
    %942 = vmatpush1.bf16.msra.mxu0 %v528
    %943 = vmatprep.subr.bf16.mxu0 %v533
    %944 = vmatpush1.bf16.msra.mxu0 %v532
    %945 = vmatprep.subr.bf16.mxu0 %v537
    %946 = vmatpush1.bf16.msra.mxu0 %v536
    %947 = vmatprep.subr.bf16.mxu0 %v541
    %948 = vmatpush1.bf16.msra.mxu0 %v540
    %949 = vmatprep.subr.bf16.mxu0 %v545
    %950 = vmatpush1.bf16.msra.mxu0 %v544
    %951 = vmatprep.subr.bf16.mxu0 %v549
    %952 = vmatpush1.bf16.msra.mxu0 %v548
    %953 = vmatprep.subr.bf16.mxu0 %v553
    %954 = vmatpush1.bf16.msra.mxu0 %v552
    %955 = vmatprep.subr.bf16.mxu0 %v557
    %956 = vmatpush1.bf16.msra.mxu0 %v556
    %957 = vmatprep.subr.bf16.mxu0 %v561
    %958 = vmatpush1.bf16.msra.mxu0 %v560
    %959 = vmatprep.subr.bf16.mxu0 %v565
    %960 = vmatpush1.bf16.msra.mxu0 %v564
    %961 = vmatprep.subr.bf16.mxu0 %v569
    %962 = vmatpush1.bf16.msra.mxu0 %v568
    %963 = vmatprep.subr.bf16.mxu0 %v573
    %964 = vmatpush1.bf16.msra.mxu0 %v572
    %965 = vmatprep.subr.bf16.mxu0 %v577
    %966 = vmatpush1.bf16.msra.mxu0 %v576
    %967 = vmatprep.subr.bf16.mxu0 %v581
    %968 = vmatpush1.bf16.msra.mxu0 %v580
    %969 = vmatprep.mubr.bf16.mxu0 %v449
    %970 = vmatmul.mubr.bf16.gmra.mrb[0].mxu0 %v448
    %v971 = vpop.f32.mrb[0].mxu0
    %v972 = vadd.f32 %v931, %v971
    %v973 = vpop.f32.mrb[0].mxu0
    %v974 = vadd.f32 %v933, %v973
    %v975 = vpop.f32.mrb[0].mxu0
    %v976 = vpop.f32.mrb[0].mxu0
    %977 = vdwg.mxu0
    %978 = vmatprep.subr.bf16.mxu0 %v585
    %979 = vmatpush1.bf16.msra.mxu0 %v584
    %980 = vmatprep.subr.bf16.mxu0 %v589
    %981 = vmatpush1.bf16.msra.mxu0 %v588
    %982 = vmatprep.subr.bf16.mxu0 %v593
    %983 = vmatpush1.bf16.msra.mxu0 %v592
    %984 = vmatprep.subr.bf16.mxu0 %v597
    %985 = vmatpush1.bf16.msra.mxu0 %v596
    %986 = vmatprep.subr.bf16.mxu0 %v601
    %987 = vmatpush1.bf16.msra.mxu0 %v600
    %988 = vmatprep.subr.bf16.mxu0 %v605
    %989 = vmatpush1.bf16.msra.mxu0 %v604
    %990 = vmatprep.subr.bf16.mxu0 %v609
    %991 = vmatpush1.bf16.msra.mxu0 %v608
    %992 = vmatprep.subr.bf16.mxu0 %v613
    %993 = vmatpush1.bf16.msra.mxu0 %v612
    %994 = vmatprep.subr.bf16.mxu0 %v617
    %995 = vmatpush1.bf16.msra.mxu0 %v616
    %996 = vmatprep.subr.bf16.mxu0 %v621
    %997 = vmatpush1.bf16.msra.mxu0 %v620
    %998 = vmatprep.subr.bf16.mxu0 %v625
    %999 = vmatpush1.bf16.msra.mxu0 %v624
    %1000 = vmatprep.subr.bf16.mxu0 %v629
    %1001 = vmatpush1.bf16.msra.mxu0 %v628
    %1002 = vmatprep.subr.bf16.mxu0 %v633
    %1003 = vmatpush1.bf16.msra.mxu0 %v632
    %1004 = vmatprep.subr.bf16.mxu0 %v637
    %1005 = vmatpush1.bf16.msra.mxu0 %v636
    %1006 = vmatprep.subr.bf16.mxu0 %v641
    %1007 = vmatpush1.bf16.msra.mxu0 %v640
    %1008 = vmatprep.subr.bf16.mxu0 %v645
    %1009 = vmatpush1.bf16.msra.mxu0 %v644
    %1010 = vmatprep.mubr.bf16.mxu0 %v451
    %1011 = vmatmul.mubr.bf16.gmra.mrb[0].mxu0 %v450
    %v1012 = vpop.f32.mrb[0].mxu0
    %v1013 = vadd.f32 %v972, %v1012
    %v1014 = vpop.f32.mrb[0].mxu0
    %v1015 = vadd.f32 %v974, %v1014
    %v1016 = vpop.f32.mrb[0].mxu0
    %v1017 = vpop.f32.mrb[0].mxu0
    %1018 = vdwg.mxu0
    %1019 = vmatprep.subr.bf16.mxu0 %v649
    %1020 = vmatpush1.bf16.msra.mxu0 %v648
    %1021 = vmatprep.subr.bf16.mxu0 %v653
    %1022 = vmatpush1.bf16.msra.mxu0 %v652
    %1023 = vmatprep.subr.bf16.mxu0 %v657
    %1024 = vmatpush1.bf16.msra.mxu0 %v656
    %1025 = vmatprep.subr.bf16.mxu0 %v661
    %1026 = vmatpush1.bf16.msra.mxu0 %v660
    %1027 = vmatprep.subr.bf16.mxu0 %v665
    %1028 = vmatpush1.bf16.msra.mxu0 %v664
    %1029 = vmatprep.subr.bf16.mxu0 %v669
    %1030 = vmatpush1.bf16.msra.mxu0 %v668
    %1031 = vmatprep.subr.bf16.mxu0 %v673
    %1032 = vmatpush1.bf16.msra.mxu0 %v672
    %1033 = vmatprep.subr.bf16.mxu0 %v677
    %1034 = vmatpush1.bf16.msra.mxu0 %v676
    %1035 = vmatprep.subr.bf16.mxu0 %v681
    %1036 = vmatpush1.bf16.msra.mxu0 %v680
    %1037 = vmatprep.subr.bf16.mxu0 %v685
    %1038 = vmatpush1.bf16.msra.mxu0 %v684
    %1039 = vmatprep.subr.bf16.mxu0 %v689
    %1040 = vmatpush1.bf16.msra.mxu0 %v688
    %1041 = vmatprep.subr.bf16.mxu0 %v693
    %1042 = vmatpush1.bf16.msra.mxu0 %v692
    %1043 = vmatprep.subr.bf16.mxu0 %v697
    %1044 = vmatpush1.bf16.msra.mxu0 %v696
    %1045 = vmatprep.subr.bf16.mxu0 %v701
    %1046 = vmatpush1.bf16.msra.mxu0 %v700
    %1047 = vmatprep.subr.bf16.mxu0 %v705
    %1048 = vmatpush1.bf16.msra.mxu0 %v704
    %1049 = vmatprep.subr.bf16.mxu0 %v709
    %1050 = vmatpush1.bf16.msra.mxu0 %v708
    %1051 = vmatprep.mubr.bf16.mxu0 %v453
    %1052 = vmatmul.mubr.bf16.gmra.mrb[0].mxu0 %v452
    %v1053 = vpop.f32.mrb[0].mxu0
    %v1054 = vadd.f32 %v1013, %v1053
    %v1055 = vpop.f32.mrb[0].mxu0
    %v1056 = vadd.f32 %v1015, %v1055
    %v1057 = vpop.f32.mrb[0].mxu0
    %v1058 = vpop.f32.mrb[0].mxu0
    %1059 = vdwg.mxu0
    %v1060 = vmax.f32 %v890, 0.0
    %v1061 = vmax.f32 %v892, 0.0
    %v1062 = vmax.f32 %v1054, 0.0
    %v1063 = vmax.f32 %v1056, 0.0
    %s1064 = smul.u32 4, 64
    %s1065 = smul.u32 %s1064, 2
    %s1066 = sshll.u32 %s1065, 4
    %1067 = dma.done %s80, %s1066
    %v1068 = vpack.c.bf16 %v1060, %v1060
    %v1069 = vpack.c.bf16 %v1061, %v1061
    %v1070 = vpack.c.bf16 %v1062, %v1062
    %v1071 = vpack.c.bf16 %v1063, %v1063
    %v1072 = vld [vmem:[#allocation3] sm:$0xff]
    %v1073 = vld [vmem:[#allocation3 + $0x8] sm:$0xff]
    %v1074 = vld [vmem:[#allocation3 + $0x10] sm:$0xff]
    %v1075 = vld [vmem:[#allocation3 + $0x18] sm:$0xff]
    %v1076 = vld [vmem:[#allocation3 + $0x20] sm:$0xff]
    %v1077 = vld [vmem:[#allocation3 + $0x28] sm:$0xff]
    %v1078 = vld [vmem:[#allocation3 + $0x30] sm:$0xff]
    %v1079 = vld [vmem:[#allocation3 + $0x38] sm:$0xff]
    %v1080 = vld [vmem:[#allocation3 + $0x40] sm:$0xff]
    %v1081 = vld [vmem:[#allocation3 + $0x48] sm:$0xff]
    %v1082 = vld [vmem:[#allocation3 + $0x50] sm:$0xff]
    %v1083 = vld [vmem:[#allocation3 + $0x58] sm:$0xff]
    %v1084 = vld [vmem:[#allocation3 + $0x60] sm:$0xff]
    %v1085 = vld [vmem:[#allocation3 + $0x68] sm:$0xff]
    %v1086 = vld [vmem:[#allocation3 + $0x70] sm:$0xff]
    %v1087 = vld [vmem:[#allocation3 + $0x78] sm:$0xff]
    %v1088 = vld [vmem:[#allocation3 + $0x80] sm:$0xff]
    %v1089 = vld [vmem:[#allocation3 + $0x88] sm:$0xff]
    %v1090 = vld [vmem:[#allocation3 + $0x90] sm:$0xff]
    %v1091 = vld [vmem:[#allocation3 + $0x98] sm:$0xff]
    %v1092 = vld [vmem:[#allocation3 + $0xa0] sm:$0xff]
    %v1093 = vld [vmem:[#allocation3 + $0xa8] sm:$0xff]
    %v1094 = vld [vmem:[#allocation3 + $0xb0] sm:$0xff]
    %v1095 = vld [vmem:[#allocation3 + $0xb8] sm:$0xff]
    %v1096 = vld [vmem:[#allocation3 + $0xc0] sm:$0xff]
    %v1097 = vld [vmem:[#allocation3 + $0xc8] sm:$0xff]
    %v1098 = vld [vmem:[#allocation3 + $0xd0] sm:$0xff]
    %v1099 = vld [vmem:[#allocation3 + $0xd8] sm:$0xff]
    %v1100 = vld [vmem:[#allocation3 + $0xe0] sm:$0xff]
    %v1101 = vld [vmem:[#allocation3 + $0xe8] sm:$0xff]
    %v1102 = vld [vmem:[#allocation3 + $0xf0] sm:$0xff]
    %v1103 = vld [vmem:[#allocation3 + $0xf8] sm:$0xff]
    %v1104 = vld [vmem:[#allocation3 + $0x100] sm:$0xff]
    %v1105 = vld [vmem:[#allocation3 + $0x108] sm:$0xff]
    %v1106 = vld [vmem:[#allocation3 + $0x110] sm:$0xff]
    %v1107 = vld [vmem:[#allocation3 + $0x118] sm:$0xff]
    %v1108 = vld [vmem:[#allocation3 + $0x120] sm:$0xff]
    %v1109 = vld [vmem:[#allocation3 + $0x128] sm:$0xff]
    %v1110 = vld [vmem:[#allocation3 + $0x130] sm:$0xff]
    %v1111 = vld [vmem:[#allocation3 + $0x138] sm:$0xff]
    %v1112 = vld [vmem:[#allocation3 + $0x140] sm:$0xff]
    %v1113 = vld [vmem:[#allocation3 + $0x148] sm:$0xff]
    %v1114 = vld [vmem:[#allocation3 + $0x150] sm:$0xff]
    %v1115 = vld [vmem:[#allocation3 + $0x158] sm:$0xff]
    %v1116 = vld [vmem:[#allocation3 + $0x160] sm:$0xff]
    %v1117 = vld [vmem:[#allocation3 + $0x168] sm:$0xff]
    %v1118 = vld [vmem:[#allocation3 + $0x170] sm:$0xff]
    %v1119 = vld [vmem:[#allocation3 + $0x178] sm:$0xff]
    %v1120 = vld [vmem:[#allocation3 + $0x180] sm:$0xff]
    %v1121 = vld [vmem:[#allocation3 + $0x188] sm:$0xff]
    %v1122 = vld [vmem:[#allocation3 + $0x190] sm:$0xff]
    %v1123 = vld [vmem:[#allocation3 + $0x198] sm:$0xff]
    %v1124 = vld [vmem:[#allocation3 + $0x1a0] sm:$0xff]
    %v1125 = vld [vmem:[#allocation3 + $0x1a8] sm:$0xff]
    %v1126 = vld [vmem:[#allocation3 + $0x1b0] sm:$0xff]
    %v1127 = vld [vmem:[#allocation3 + $0x1b8] sm:$0xff]
    %v1128 = vld [vmem:[#allocation3 + $0x1c0] sm:$0xff]
    %v1129 = vld [vmem:[#allocation3 + $0x1c8] sm:$0xff]
    %v1130 = vld [vmem:[#allocation3 + $0x1d0] sm:$0xff]
    %v1131 = vld [vmem:[#allocation3 + $0x1d8] sm:$0xff]
    %v1132 = vld [vmem:[#allocation3 + $0x1e0] sm:$0xff]
    %v1133 = vld [vmem:[#allocation3 + $0x1e8] sm:$0xff]
    %v1134 = vld [vmem:[#allocation3 + $0x1f0] sm:$0xff]
    %v1135 = vld [vmem:[#allocation3 + $0x1f8] sm:$0xff]
    %v1136 = vld [vmem:[%s5 + $0xc] sm:$0x3]
    %v1138 = vlaneseq
    %v1139 = vshrl.u32 %v1138, 7
    %v1140 = vsub.s32 0, %v1139
    %v1141 = vrot.slane %v1136, %v1140
    %v1142 = vlaneseq
    %v1143 = vshrl.u32 %v1142, 7
    %v1144 = vsub.s32 1, %v1143
    %v1145 = vrot.slane %v1136, %v1144
    %1148 = vmatprep.subr.bf16.mxu0 %v1073
    %1149 = vmatpush1.bf16.msra.mxu0 %v1072
    %1150 = vmatprep.subr.bf16.mxu0 %v1075
    %1151 = vmatpush1.bf16.msra.mxu0 %v1074
    %1152 = vmatprep.subr.bf16.mxu0 %v1077
    %1153 = vmatpush1.bf16.msra.mxu0 %v1076
    %1154 = vmatprep.subr.bf16.mxu0 %v1079
    %1155 = vmatpush1.bf16.msra.mxu0 %v1078
    %1156 = vmatprep.subr.bf16.mxu0 %v1081
    %1157 = vmatpush1.bf16.msra.mxu0 %v1080
    %1158 = vmatprep.subr.bf16.mxu0 %v1083
    %1159 = vmatpush1.bf16.msra.mxu0 %v1082
    %1160 = vmatprep.subr.bf16.mxu0 %v1085
    %1161 = vmatpush1.bf16.msra.mxu0 %v1084
    %1162 = vmatprep.subr.bf16.mxu0 %v1087
    %1163 = vmatpush1.bf16.msra.mxu0 %v1086
    %1164 = vmatprep.subr.bf16.mxu0 %v1089
    %1165 = vmatpush1.bf16.msra.mxu0 %v1088
    %1166 = vmatprep.subr.bf16.mxu0 %v1091
    %1167 = vmatpush1.bf16.msra.mxu0 %v1090
    %1168 = vmatprep.subr.bf16.mxu0 %v1093
    %1169 = vmatpush1.bf16.msra.mxu0 %v1092
    %1170 = vmatprep.subr.bf16.mxu0 %v1095
    %1171 = vmatpush1.bf16.msra.mxu0 %v1094
    %1172 = vmatprep.subr.bf16.mxu0 %v1097
    %1173 = vmatpush1.bf16.msra.mxu0 %v1096
    %1174 = vmatprep.subr.bf16.mxu0 %v1099
    %1175 = vmatpush1.bf16.msra.mxu0 %v1098
    %1176 = vmatprep.subr.bf16.mxu0 %v1101
    %1177 = vmatpush1.bf16.msra.mxu0 %v1100
    %1178 = vmatprep.subr.bf16.mxu0 %v1103
    %1179 = vmatpush1.bf16.msra.mxu0 %v1102
    %1180 = vmatprep.mubr.bf16.mxu0 %v1069
    %1181 = vmatmul.mubr.bf16.gmra.mrb[0].mxu0 %v1068
    %v1182 = vpop.f32.mrb[0].mxu0
    %v1183 = vadd.f32 %v1141, %v1182
    %v1184 = vpop.f32.mrb[0].mxu0
    %v1185 = vadd.f32 %v1145, %v1184
    %v1186 = vpop.f32.mrb[0].mxu0
    %v1187 = vpop.f32.mrb[0].mxu0
    %1188 = vdwg.mxu0
    %1189 = vmatprep.subr.bf16.mxu0 %v1105
    %1190 = vmatpush1.bf16.msra.mxu0 %v1104
    %1191 = vmatprep.subr.bf16.mxu0 %v1107
    %1192 = vmatpush1.bf16.msra.mxu0 %v1106
    %1193 = vmatprep.subr.bf16.mxu0 %v1109
    %1194 = vmatpush1.bf16.msra.mxu0 %v1108
    %1195 = vmatprep.subr.bf16.mxu0 %v1111
    %1196 = vmatpush1.bf16.msra.mxu0 %v1110
    %1197 = vmatprep.subr.bf16.mxu0 %v1113
    %1198 = vmatpush1.bf16.msra.mxu0 %v1112
    %1199 = vmatprep.subr.bf16.mxu0 %v1115
    %1200 = vmatpush1.bf16.msra.mxu0 %v1114
    %1201 = vmatprep.subr.bf16.mxu0 %v1117
    %1202 = vmatpush1.bf16.msra.mxu0 %v1116
    %1203 = vmatprep.subr.bf16.mxu0 %v1119
    %1204 = vmatpush1.bf16.msra.mxu0 %v1118
    %1205 = vmatprep.subr.bf16.mxu0 %v1121
    %1206 = vmatpush1.bf16.msra.mxu0 %v1120
    %1207 = vmatprep.subr.bf16.mxu0 %v1123
    %1208 = vmatpush1.bf16.msra.mxu0 %v1122
    %1209 = vmatprep.subr.bf16.mxu0 %v1125
    %1210 = vmatpush1.bf16.msra.mxu0 %v1124
    %1211 = vmatprep.subr.bf16.mxu0 %v1127
    %1212 = vmatpush1.bf16.msra.mxu0 %v1126
    %1213 = vmatprep.subr.bf16.mxu0 %v1129
    %1214 = vmatpush1.bf16.msra.mxu0 %v1128
    %1215 = vmatprep.subr.bf16.mxu0 %v1131
    %1216 = vmatpush1.bf16.msra.mxu0 %v1130
    %1217 = vmatprep.subr.bf16.mxu0 %v1133
    %1218 = vmatpush1.bf16.msra.mxu0 %v1132
    %1219 = vmatprep.subr.bf16.mxu0 %v1135
    %1220 = vmatpush1.bf16.msra.mxu0 %v1134
    %1221 = vmatprep.mubr.bf16.mxu0 %v1071
    %1222 = vmatmul.mubr.bf16.gmra.mrb[0].mxu0 %v1070
    %v1223 = vpop.f32.mrb[0].mxu0
    %v1224 = vadd.f32 %v1183, %v1223
    %v1225 = vpop.f32.mrb[0].mxu0
    %v1226 = vadd.f32 %v1185, %v1225
    %v1227 = vpop.f32.mrb[0].mxu0
    %v1228 = vpop.f32.mrb[0].mxu0
    %1229 = vdwg.mxu0
    %v1230 = vmax.f32 %v1224, 0.0
    %v1231 = vmax.f32 %v1226, 0.0
    %s1232 = smul.u32 4, 32
    %s1233 = smul.u32 %s1232, 1
    %s1234 = sshll.u32 %s1233, 4
    %1235 = dma.done %s115, %s1234
    %v1236 = vpack.c.bf16 %v1230, %v1230
    %v1237 = vpack.c.bf16 %v1231, %v1231
    %v1238 = vld [vmem:[#allocation4] sm:$0xff]
    %v1239 = vld [vmem:[#allocation4 + $0x8] sm:$0xff]
    %v1240 = vld [vmem:[#allocation4 + $0x10] sm:$0xff]
    %v1241 = vld [vmem:[#allocation4 + $0x18] sm:$0xff]
    %v1242 = vld [vmem:[#allocation4 + $0x20] sm:$0xff]
    %v1243 = vld [vmem:[#allocation4 + $0x28] sm:$0xff]
    %v1244 = vld [vmem:[#allocation4 + $0x30] sm:$0xff]
    %v1245 = vld [vmem:[#allocation4 + $0x38] sm:$0xff]
    %v1246 = vld [vmem:[#allocation4 + $0x40] sm:$0xff]
    %v1247 = vld [vmem:[#allocation4 + $0x48] sm:$0xff]
    %v1248 = vld [vmem:[#allocation4 + $0x50] sm:$0xff]
    %v1249 = vld [vmem:[#allocation4 + $0x58] sm:$0xff]
    %v1250 = vld [vmem:[#allocation4 + $0x60] sm:$0xff]
    %v1251 = vld [vmem:[#allocation4 + $0x68] sm:$0xff]
    %v1252 = vld [vmem:[#allocation4 + $0x70] sm:$0xff]
    %v1253 = vld [vmem:[#allocation4 + $0x78] sm:$0xff]
    %v1254 = vld [vmem:[%s5 + $0xe] sm:$0x1]
    %v1256 = vlaneseq
    %v1257 = vshrl.u32 %v1256, 7
    %v1258 = vsub.s32 0, %v1257
    %v1259 = vrot.slane %v1254, %v1258
    %1261 = vmatprep.subr.bf16.mxu0 0
    %1262 = vmatpush1.bf16.msra.mxu0 %v1238
    %1263 = vmatprep.subr.bf16.mxu0 0
    %1264 = vmatpush1.bf16.msra.mxu0 %v1239
    %1265 = vmatprep.subr.bf16.mxu0 0
    %1266 = vmatpush1.bf16.msra.mxu0 %v1240
    %1267 = vmatprep.subr.bf16.mxu0 0
    %1268 = vmatpush1.bf16.msra.mxu0 %v1241
    %1269 = vmatprep.subr.bf16.mxu0 0
    %1270 = vmatpush1.bf16.msra.mxu0 %v1242
    %1271 = vmatprep.subr.bf16.mxu0 0
    %1272 = vmatpush1.bf16.msra.mxu0 %v1243
    %1273 = vmatprep.subr.bf16.mxu0 0
    %1274 = vmatpush1.bf16.msra.mxu0 %v1244
    %1275 = vmatprep.subr.bf16.mxu0 0
    %1276 = vmatpush1.bf16.msra.mxu0 %v1245
    %1277 = vmatprep.subr.bf16.mxu0 0
    %1278 = vmatpush1.bf16.msra.mxu0 %v1246
    %1279 = vmatprep.subr.bf16.mxu0 0
    %1280 = vmatpush1.bf16.msra.mxu0 %v1247
    %1281 = vmatprep.subr.bf16.mxu0 0
    %1282 = vmatpush1.bf16.msra.mxu0 %v1248
    %1283 = vmatprep.subr.bf16.mxu0 0
    %1284 = vmatpush1.bf16.msra.mxu0 %v1249
    %1285 = vmatprep.subr.bf16.mxu0 0
    %1286 = vmatpush1.bf16.msra.mxu0 %v1250
    %1287 = vmatprep.subr.bf16.mxu0 0
    %1288 = vmatpush1.bf16.msra.mxu0 %v1251
    %1289 = vmatprep.subr.bf16.mxu0 0
    %1290 = vmatpush1.bf16.msra.mxu0 %v1252
    %1291 = vmatprep.subr.bf16.mxu0 0
    %1292 = vmatpush1.bf16.msra.mxu0 %v1253
    %1293 = vmatprep.mubr.bf16.mxu0 %v1237
    %1294 = vmatmul.mubr.bf16.gmra.mrb[0].mxu0 %v1236
    %v1295 = vpop.f32.mrb[0].mxu0
    %v1296 = vadd.f32 %v1259, %v1295
    %v1297 = vpop.f32.mrb[0].mxu0
    %v1298 = vpop.f32.mrb[0].mxu0
    %v1299 = vpop.f32.mrb[0].mxu0
    %1300 = vdwg.mxu0
    %1301 = vst [vmem:[#allocation11] sm:$0xff] %v1296
    // Predicated region
    $region26: #{tpu_custom_call.1} parent=1 // pred_check
      _
    $region27: #{tpu_custom_call.1} parent=1 // pred_check_branch
      %1303 = sbr.rel (0) target = $region29
    $region28: #{tpu_custom_call.1} parent=1 // pred_region
      %s1305 = ssub.s32 128, 128
      %1306 = vsyncadd [#allocation8], %s1305
      %s1308 = sshll.u32 [#allocation11], 4
      %s1309 = int_to_ptr.vmem [resolvable:$true] %s1308
      %1311 = dma.vmem_to_hbm [thread:$0]  %s1309, 128, %s6, [#allocation8]
    $region29: #{tpu_custom_call.1} parent=1 // pred_fallthru
      _
    // Predicated region
    $region30: #{tpu_custom_call.1} parent=1 // pred_check
      _
    $region31: #{tpu_custom_call.1} parent=1 // pred_check_branch
      %1313 = sbr.rel (0) target = $region33
    $region32: #{tpu_custom_call.1} parent=1 // pred_region
      %1314 = dma.done [#allocation8], 128
    $region33: #{tpu_custom_call.1} parent=1 // pred_fallthru
      _
    %1315 = vsyncpa [#allocation7], 1
    %1316 = vsyncpa [#allocation10], 1
    %1317 = vsyncpa [#allocation8], 1
  %1318 = vsyncmov [#allocation5]
  %s1319 = vpop.sfrf %1318
  %p1320 = scmp.eq.s32.totalorder %s1319, 0
  %p1321 = pneg %p1320
  %1323 = shalt.err (%p1321)
  %s1324 = scalar_lea.sflag [#allocation5], 1
  %1325 = vsyncmov %s1324
  %s1326 = vpop.sfrf %1325
  %p1327 = scmp.eq.s32.totalorder %s1326, 0
  %p1328 = pneg %p1327
  %1330 = shalt.err (%p1328)
  %s1331 = scalar_lea.sflag [#allocation5], 2
  %1332 = vsyncmov %s1331
  %s1333 = vpop.sfrf %1332
  %p1334 = scmp.eq.s32.totalorder %s1333, 0
  %p1335 = pneg %p1334
  %1337 = shalt.err (%p1335)

</llo_original>
